<compile_context>
chip_gen: v5e
topology: v5e:2x2
jax: 0.10.0
libtpu: 0.0.40
codegen_flags: <defaults>
</compile_context>

<pallas_src>
import math
import numpy as np
import jax
import jax.numpy as jnp
from jax.experimental import pallas as pl
from jax.experimental.pallas import tpu as pltpu


# ---------------------------------------------------------------------------
# Interpolation-weight builders (run in the WRAPPER, once per call).
# ---------------------------------------------------------------------------
def _bilinear_weights(out_size, in_size, crop_off, crop_len, out_axis):
    """Weights mapping crop [crop_off, crop_off+crop_len) of an axis of length
    `in_size` to `out_size` samples (PyTorch bilinear, align_corners=False).
    out_axis == 0 -> (out_size, in_size);  out_axis == 1 -> (in_size, out_size)."""
    shape = (out_size, in_size) if out_axis == 0 else (in_size, out_size)
    dst = jax.lax.broadcasted_iota(jnp.float32, shape, out_axis)      # output index
    col = jax.lax.broadcasted_iota(jnp.int32, shape, 1 - out_axis)    # input index
    scale = crop_len.astype(jnp.float32) / float(out_size)
    src = scale * (dst + 0.5) - 0.5
    src = jnp.maximum(src, 0.0)
    i0 = jnp.minimum(jnp.floor(src).astype(jnp.int32), crop_len - 1)
    i1 = jnp.minimum(i0 + 1, crop_len - 1)
    lam = src - i0.astype(jnp.float32)
    w0 = jnp.where(col == i0 + crop_off, 1.0 - lam, 0.0)
    w1 = jnp.where(col == i1 + crop_off, lam, 0.0)
    return (w0 + w1).astype(jnp.float32)


def _nearest_weights(out_size, in_size, crop_off, crop_len, out_axis):
    """One-hot weights for PyTorch 'nearest' interpolation of a crop."""
    shape = (out_size, in_size) if out_axis == 0 else (in_size, out_size)
    dst = jax.lax.broadcasted_iota(jnp.float32, shape, out_axis)
    col = jax.lax.broadcasted_iota(jnp.int32, shape, 1 - out_axis)
    scale = crop_len.astype(jnp.float32) / float(out_size)
    src = jnp.minimum(jnp.floor(dst * scale).astype(jnp.int32), crop_len - 1)
    return jnp.where(col == src + crop_off, 1.0, 0.0).astype(jnp.float32)


def _row_blocked(wy, NRB, RT):
    """wy: (OUT, H) with H == NRB*RT  ->  (NRB, OUT, RT) so the kernel selects
    the per-row-block slice with a single dynamic first-axis index (no dynamic
    lane-dim slicing, no block-diagonal fold)."""
    OUT = wy.shape[0]
    return wy.reshape(OUT, NRB, RT).transpose(1, 0, 2)


def _pick_row_tile(H):
    """Largest row tile in {256,128,64,32,16,8} dividing H with >= 2 blocks
    (fills the MXU contraction depth: 256 on v6e/v7x, 128 on v5e); else H."""
    if H % 8 == 0:
        for rt in (256, 128, 64, 32, 16, 8):
            if H % rt == 0 and H // rt >= 2:
                return rt
    return H


# ---------------------------------------------------------------------------
# Pallas kernel.  Grid = (batch, row_block).  Vertical pass accumulates over
# crop row blocks (per-channel MXU dots, weights resident in VMEM); the
# horizontal pass runs once on the last row block.
# ---------------------------------------------------------------------------
def _rrc_kernel(params_ref,
                img1_ref, wy1_ref, wx1_ref,
                img2_ref, wy2_ref, wx2_ref,
                out1_ref, out2_ref,
                acc1_ref, acc2_ref):
    rb = pl.program_id(1)
    nrb = pl.num_programs(1)
    rb_lo = params_ref[4]
    rb_hi = params_ref[5]
    C = img1_ref.shape[1]

    @pl.when(rb == 0)
    def _init():
        acc1_ref[...] = jnp.zeros_like(acc1_ref)
        acc2_ref[...] = jnp.zeros_like(acc2_ref)

    # Only row blocks overlapping the crop [i, i+h) contribute; weight columns
    # outside the crop are zero, so partially covered blocks are exact.
    @pl.when(jnp.logical_and(rb >= rb_lo, rb <= rb_hi))
    def _accumulate():
        wy1 = wy1_ref[rb]                       # (OUT, RT), resident in VMEM
        wy2 = wy2_ref[rb]
        for c in range(C):                      # static unroll over channels
            acc1_ref[c] += jnp.dot(wy1, img1_ref[0, c],
                                   preferred_element_type=jnp.float32)
            acc2_ref[c] += jnp.dot(wy2, img2_ref[0, c],
                                   preferred_element_type=jnp.float32)

    @pl.when(rb == nrb - 1)
    def _finalize():
        wx1 = wx1_ref[...]                      # (W, OUT), resident in VMEM
        wx2 = wx2_ref[...]
        for c in range(C):
            y1 = jnp.dot(acc1_ref[c].astype(wx1.dtype), wx1,
                         preferred_element_type=jnp.float32)
            y2 = jnp.dot(acc2_ref[c].astype(wx2.dtype), wx2,
                         preferred_element_type=jnp.float32)
            out1_ref[0, c] = y1.astype(out1_ref.dtype)
            out2_ref[0, c] = y2.astype(out2_ref.dtype)


def random_resized_crop_seg(img1, img2, crop_params, out_size):
    """crop_params = int32[4] = (i, j, h, w) (dynamic, no recompile per crop).
    Returns (bilinear_resized_crop(img1), nearest_resized_crop(img2)) as f32
    NCHW of spatial size (out_size, out_size).  Feed bf16 images to halve the
    kernel's HBM read traffic (exact for integer segmentation labels <= 256)."""
    N, C, H, W = img1.shape
    assert img2.shape == img1.shape
    OUT = int(out_size)

    RT = _pick_row_tile(H)           # row tile (multiple of 8 or full H)
    NRB = H // RT

    crop_params = crop_params.astype(jnp.int32)
    i, j, h, w = crop_params[0], crop_params[1], crop_params[2], crop_params[3]
    rb_lo = i // RT
    rb_hi = (i + h - 1) // RT
    params6 = jnp.concatenate(
        [crop_params, jnp.stack([rb_lo, rb_hi]).astype(jnp.int32)])

    # ---- interpolation weights: built ONCE per call, outside the kernel ----
    wy_b = _row_blocked(_bilinear_weights(OUT, H, i, h, 0), NRB, RT).astype(img1.dtype)
    wy_n = _row_blocked(_nearest_weights(OUT, H, i, h, 0), NRB, RT).astype(img2.dtype)
    wx_b = _bilinear_weights(OUT, W, j, w, 1).astype(img1.dtype)     # (W, OUT)
    wx_n = _nearest_weights(OUT, W, j, w, 1).astype(img2.dtype)      # (W, OUT)

    def img_map(n, rb, p):                     # clamp -> crop-window-only DMA
        return (n, 0, jnp.clip(rb, p[4], p[5]), 0)

    const_wy = lambda n, rb, p: (0, 0, 0)      # resident: DMA'd once
    const_wx = lambda n, rb, p: (0, 0)

    grid_spec = pltpu.PrefetchScalarGridSpec(
        num_scalar_prefetch=1,
        grid=(N, NRB),
        in_specs=[
            pl.BlockSpec((1, C, RT, W), img_map),
            pl.BlockSpec((NRB, OUT, RT), const_wy),
            pl.BlockSpec((W, OUT), const_wx),
            pl.BlockSpec((1, C, RT, W), img_map),
            pl.BlockSpec((NRB, OUT, RT), const_wy),
            pl.BlockSpec((W, OUT), const_wx),
        ],
        out_specs=[
            pl.BlockSpec((1, C, OUT, OUT), lambda n, rb, p: (n, 0, 0, 0)),
            pl.BlockSpec((1, C, OUT, OUT), lambda n, rb, p: (n, 0, 0, 0)),
        ],
        scratch_shapes=[
            pltpu.VMEM((C, OUT, W), jnp.float32),
            pltpu.VMEM((C, OUT, W), jnp.float32),
        ],
    )
    out_shape = (
        jax.ShapeDtypeStruct((N, C, OUT, OUT), jnp.float32),
        jax.ShapeDtypeStruct((N, C, OUT, OUT), jnp.float32),
    )
    return pl.pallas_call(
        _rrc_kernel,
        out_shape=out_shape,
        grid_spec=grid_spec,
        compiler_params=pltpu.CompilerParams(
            dimension_semantics=("parallel", "arbitrary"),
            vmem_limit_bytes=48 * 1024 * 1024),   # covers v5e's 16 MiB default
    )(params6, img1, wy_b, wx_b, img2, wy_n, wx_n)


# ---------------------------------------------------------------------------
# Host-side random crop-parameter sampling (mirror of the module's get_params).
# TODO(synk): uses host numpy RNG in place of torch's host-side RNG.
# ---------------------------------------------------------------------------
def get_params(height, width, scale, ratio, rng):
    area = height * width
    log_ratio = (math.log(ratio[0]), math.log(ratio[1]))
    for _ in range(10):
        target_area = area * rng.uniform(scale[0], scale[1])
        aspect_ratio = math.exp(rng.uniform(log_ratio[0], log_ratio[1]))
        w = int(round(math.sqrt(target_area * aspect_ratio)))
        h = int(round(math.sqrt(target_area / aspect_ratio)))
        if 0 < w <= width and 0 < h <= height:
            i = int(rng.integers(0, height - h + 1))
            j = int(rng.integers(0, width - w + 1))
            return i, j, h, w
    in_ratio = float(width) / float(height)
    if in_ratio < min(ratio):
        w = width
        h = int(round(w / min(ratio)))
    elif in_ratio > max(ratio):
        h = height
        w = int(round(h * max(ratio)))
    else:
        w = width
        h = height
    i = (height - h) // 2
    j = (width - w) // 2
    return i, j, h, w


# ---------------------------------------------------------------------------
# Pure-numpy references for the sanity check.
# ---------------------------------------------------------------------------
def _np_bilinear_resize(x, out_h, out_w):
    _, _, h, w = x.shape

    def coords(out, inn):
        scale = inn / out
        src = np.maximum(scale * (np.arange(out) + 0.5) - 0.5, 0.0)
        i0 = np.minimum(np.floor(src).astype(np.int64), inn - 1)
        i1 = np.minimum(i0 + 1, inn - 1)
        return i0, i1, src - i0

    y0, y1, ly = coords(out_h, h)
    x0, x1, lx = coords(out_w, w)
    top = x[:, :, y0][:, :, :, x0] * (1 - lx) + x[:, :, y0][:, :, :, x1] * lx
    bot = x[:, :, y1][:, :, :, x0] * (1 - lx) + x[:, :, y1][:, :, :, x1] * lx
    return top * (1 - ly)[None, None, :, None] + bot * ly[None, None, :, None]


def _np_nearest_resize(x, out_h, out_w):
    _, _, h, w = x.shape
    ys = np.minimum(np.floor(np.arange(out_h) * (h / out_h)).astype(np.int64), h - 1)
    xs = np.minimum(np.floor(np.arange(out_w) * (w / out_w)).astype(np.int64), w - 1)
    return x[:, :, ys][:, :, :, xs]


if __name__ == "__main__":
    N, C, H, W = 2, 4, 16, 16
    OUT = 8

    key = jax.random.PRNGKey(0)
    k1, k2 = jax.random.split(key)
    img1_f32 = jax.random.normal(k1, (N, C, H, W), dtype=jnp.float32)
    # img2 is a segmentation map (small integer labels stored as float)
    img2_f32 = jax.random.randint(k2, (N, C, H, W), 0, 5).astype(jnp.float32)

    # bf16 inputs: halves HBM read traffic (exact for the small-integer labels).
    img1 = img1_f32.astype(jnp.bfloat16)
    img2 = img2_f32.astype(jnp.bfloat16)

    rng = np.random.default_rng(0)
    i, j, h, w = get_params(H, W, scale=(0.08, 1.0), ratio=(3.0 / 4.0, 4.0 / 3.0), rng=rng)
    params = jnp.array([i, j, h, w], dtype=jnp.int32)

    fn = jax.jit(random_resized_crop_seg, static_argnums=(3,))
    out1, out2 = fn(img1, img2, params, OUT)
    jax.block_until_ready((out1, out2))

    # reference computed from the same bf16-rounded inputs the kernel sees
    a1 = np.asarray(img1.astype(jnp.float32))
    a2 = np.asarray(img2.astype(jnp.float32))
    crop1 = a1[:, :, i:i + h, j:j + w]
    crop2 = a2[:, :, i:i + h, j:j + w]
    ref1 = _np_bilinear_resize(crop1, OUT, OUT)
    ref2 = _np_nearest_resize(crop2, OUT, OUT)

    assert out1.shape == (N, C, OUT, OUT) and out2.shape == (N, C, OUT, OUT)
    assert np.allclose(np.asarray(out1), ref1, atol=3e-2, rtol=3e-2)   # bf16 weights/MXU
    assert np.allclose(np.asarray(out2), ref2, atol=1e-5)              # nearest is exact
    print("KERNEL_OK")
</pallas_src>

<mosaic_0001>
module attributes {stable_mosaic.version = 11 : i64} {
  func.func @_rrc_kernel(%arg0: i32, %arg1: i32, %arg2: memref<6xi32, #tpu.memory_space<smem>>, %arg3: memref<1x4x8x16xbf16, #tpu.memory_space<vmem>>, %arg4: memref<2x8x8xbf16, #tpu.memory_space<vmem>>, %arg5: memref<16x8xbf16, #tpu.memory_space<vmem>>, %arg6: memref<1x4x8x16xbf16, #tpu.memory_space<vmem>>, %arg7: memref<2x8x8xbf16, #tpu.memory_space<vmem>>, %arg8: memref<16x8xbf16, #tpu.memory_space<vmem>>, %arg9: memref<1x4x8x8xf32, #tpu.memory_space<vmem>>, %arg10: memref<1x4x8x8xf32, #tpu.memory_space<vmem>>, %arg11: memref<4x8x16xf32, #tpu.memory_space<vmem>>, %arg12: memref<4x8x16xf32, #tpu.memory_space<vmem>>) attributes {dimension_semantics = [#tpu.dimension_semantics<parallel>, #tpu.dimension_semantics<arbitrary>], iteration_bounds = array<i64: 2, 2>, scalar_prefetch = 1 : i64, scratch_operands = 2 : i64, tpu.core_type = #tpu.core_type<tc>, window_params = [{transform_indices = @transform_0, window_bounds = array<i64: 1, 4, 8, 16>}, {pipeline_mode = #tpu.pipeline_mode<synchronous>, transform_indices = @transform_1, window_bounds = array<i64: 2, 8, 8>}, {pipeline_mode = #tpu.pipeline_mode<synchronous>, transform_indices = @transform_2, window_bounds = array<i64: 16, 8>}, {transform_indices = @transform_3, window_bounds = array<i64: 1, 4, 8, 16>}, {pipeline_mode = #tpu.pipeline_mode<synchronous>, transform_indices = @transform_4, window_bounds = array<i64: 2, 8, 8>}, {pipeline_mode = #tpu.pipeline_mode<synchronous>, transform_indices = @transform_5, window_bounds = array<i64: 16, 8>}, {transform_indices = @transform_6, window_bounds = array<i64: 1, 4, 8, 8>}, {transform_indices = @transform_7, window_bounds = array<i64: 1, 4, 8, 8>}]} {
    %c4 = arith.constant 4 : index
    %0 = memref.load %arg2[%c4] : memref<6xi32, #tpu.memory_space<smem>>
    %c5 = arith.constant 5 : index
    %1 = memref.load %arg2[%c5] : memref<6xi32, #tpu.memory_space<smem>>
    %c0_i32 = arith.constant 0 : i32
    %2 = arith.cmpi eq, %arg1, %c0_i32 : i32
    %3 = arith.extui %2 : i1 to i32
    %c0_i32_0 = arith.constant 0 : i32
    %4 = arith.cmpi ne, %3, %c0_i32_0 : i32
    scf.if %4 {
      %cst = arith.constant 0.000000e+00 : f32
      %13 = vector.broadcast %cst : f32 to vector<4x8x16xf32>
      %c0 = arith.constant 0 : index
      %c0_3 = arith.constant 0 : index
      %c0_4 = arith.constant 0 : index
      %14 = vector.load %arg11[%c0, %c0_3, %c0_4] : memref<4x8x16xf32, #tpu.memory_space<vmem>>, vector<4x8x16xf32>
      tpu.vector_store %arg11[%c0, %c0_3, %c0_4], %13 {strides = array<i32>} : memref<4x8x16xf32, #tpu.memory_space<vmem>>, vector<4x8x16xf32>,
      %cst_5 = arith.constant 0.000000e+00 : f32
      %15 = vector.broadcast %cst_5 : f32 to vector<4x8x16xf32>
      %c0_6 = arith.constant 0 : index
      %c0_7 = arith.constant 0 : index
      %c0_8 = arith.constant 0 : index
      %16 = vector.load %arg12[%c0_6, %c0_7, %c0_8] : memref<4x8x16xf32, #tpu.memory_space<vmem>>, vector<4x8x16xf32>
      tpu.vector_store %arg12[%c0_6, %c0_7, %c0_8], %15 {strides = array<i32>} : memref<4x8x16xf32, #tpu.memory_space<vmem>>, vector<4x8x16xf32>,
    } else {
    }
    %5 = arith.cmpi sge, %arg1, %0 : i32
    %6 = arith.cmpi sle, %arg1, %1 : i32
    %7 = arith.andi %5, %6 : i1
    %8 = arith.extui %7 : i1 to i32
    %c0_i32_1 = arith.constant 0 : i32
    %9 = arith.cmpi ne, %8, %c0_i32_1 : i32
    scf.if %9 {
      %13 = arith.index_cast %arg1 : i32 to index
      %c0 = arith.constant 0 : index
      %c0_3 = arith.constant 0 : index
      %14 = vector.load %arg4[%13, %c0, %c0_3] : memref<2x8x8xbf16, #tpu.memory_space<vmem>>, vector<1x8x8xbf16>
      %15 = vector.shape_cast %14 : vector<1x8x8xbf16> to vector<8x8xbf16>
      %16 = arith.index_cast %arg1 : i32 to index
      %c0_4 = arith.constant 0 : index
      %c0_5 = arith.constant 0 : index
      %17 = vector.load %arg7[%16, %c0_4, %c0_5] : memref<2x8x8xbf16, #tpu.memory_space<vmem>>, vector<1x8x8xbf16>
      %18 = vector.shape_cast %17 : vector<1x8x8xbf16> to vector<8x8xbf16>
      %c0_6 = arith.constant 0 : index
      %c0_7 = arith.constant 0 : index
      %c0_8 = arith.constant 0 : index
      %19 = vector.load %arg11[%c0_6, %c0_7, %c0_8] : memref<4x8x16xf32, #tpu.memory_space<vmem>>, vector<1x8x16xf32>
      %20 = vector.shape_cast %19 : vector<1x8x16xf32> to vector<8x16xf32>
      %c0_9 = arith.constant 0 : index
      %c0_10 = arith.constant 0 : index
      %c0_11 = arith.constant 0 : index
      %c0_12 = arith.constant 0 : index
      %21 = vector.load %arg3[%c0_9, %c0_10, %c0_11, %c0_12] : memref<1x4x8x16xbf16, #tpu.memory_space<vmem>>, vector<1x1x8x16xbf16>
      %22 = vector.shape_cast %21 : vector<1x1x8x16xbf16> to vector<8x16xbf16>
      %cst = arith.constant dense<0.000000e+00> : vector<8x16xf32>
      %23 = tpu.matmul %15, %22, %cst {dimension_numbers = #tpu.dot_dimension_numbers<[1], [0], [0], [1], [0, 0, 1, 1], [], []>} : vector<8x8xbf16>, vector<8x16xbf16>, vector<8x16xf32> -> vector<8x16xf32>
      %24 = arith.addf %20, %23 : vector<8x16xf32>
      %c0_13 = arith.constant 0 : index
      %c0_14 = arith.constant 0 : index
      %c0_15 = arith.constant 0 : index
      %25 = vector.load %arg11[%c0_13, %c0_14, %c0_15] : memref<4x8x16xf32, #tpu.memory_space<vmem>>, vector<1x8x16xf32>
      %26 = vector.shape_cast %25 : vector<1x8x16xf32> to vector<8x16xf32>
      %27 = vector.shape_cast %24 : vector<8x16xf32> to vector<1x8x16xf32>
      tpu.vector_store %arg11[%c0_13, %c0_14, %c0_15], %27 {strides = array<i32>} : memref<4x8x16xf32, #tpu.memory_space<vmem>>, vector<1x8x16xf32>,
      %c0_16 = arith.constant 0 : index
      %c0_17 = arith.constant 0 : index
      %c0_18 = arith.constant 0 : index
      %28 = vector.load %arg12[%c0_16, %c0_17, %c0_18] : memref<4x8x16xf32, #tpu.memory_space<vmem>>, vector<1x8x16xf32>
      %29 = vector.shape_cast %28 : vector<1x8x16xf32> to vector<8x16xf32>
      %c0_19 = arith.constant 0 : index
      %c0_20 = arith.constant 0 : index
      %c0_21 = arith.constant 0 : index
      %c0_22 = arith.constant 0 : index
      %30 = vector.load %arg6[%c0_19, %c0_20, %c0_21, %c0_22] : memref<1x4x8x16xbf16, #tpu.memory_space<vmem>>, vector<1x1x8x16xbf16>
      %31 = vector.shape_cast %30 : vector<1x1x8x16xbf16> to vector<8x16xbf16>
      %cst_23 = arith.constant dense<0.000000e+00> : vector<8x16xf32>
      %32 = tpu.matmul %18, %31, %cst_23 {dimension_numbers = #tpu.dot_dimension_numbers<[1], [0], [0], [1], [0, 0, 1, 1], [], []>} : vector<8x8xbf16>, vector<8x16xbf16>, vector<8x16xf32> -> vector<8x16xf32>
      %33 = arith.addf %29, %32 : vector<8x16xf32>
      %c0_24 = arith.constant 0 : index
      %c0_25 = arith.constant 0 : index
      %c0_26 = arith.constant 0 : index
      %34 = vector.load %arg12[%c0_24, %c0_25, %c0_26] : memref<4x8x16xf32, #tpu.memory_space<vmem>>, vector<1x8x16xf32>
      %35 = vector.shape_cast %34 : vector<1x8x16xf32> to vector<8x16xf32>
      %36 = vector.shape_cast %33 : vector<8x16xf32> to vector<1x8x16xf32>
      tpu.vector_store %arg12[%c0_24, %c0_25, %c0_26], %36 {strides = array<i32>} : memref<4x8x16xf32, #tpu.memory_space<vmem>>, vector<1x8x16xf32>,
      %c1 = arith.constant 1 : index
      %c0_27 = arith.constant 0 : index
      %c0_28 = arith.constant 0 : index
      %37 = vector.load %arg11[%c1, %c0_27, %c0_28] : memref<4x8x16xf32, #tpu.memory_space<vmem>>, vector<1x8x16xf32>
      %38 = vector.shape_cast %37 : vector<1x8x16xf32> to vector<8x16xf32>
      %c0_29 = arith.constant 0 : index
      %c1_30 = arith.constant 1 : index
      %c0_31 = arith.constant 0 : index
      %c0_32 = arith.constant 0 : index
      %39 = vector.load %arg3[%c0_29, %c1_30, %c0_31, %c0_32] : memref<1x4x8x16xbf16, #tpu.memory_space<vmem>>, vector<1x1x8x16xbf16>
      %40 = vector.shape_cast %39 : vector<1x1x8x16xbf16> to vector<8x16xbf16>
      %cst_33 = arith.constant dense<0.000000e+00> : vector<8x16xf32>
      %41 = tpu.matmul %15, %40, %cst_33 {dimension_numbers = #tpu.dot_dimension_numbers<[1], [0], [0], [1], [0, 0, 1, 1], [], []>} : vector<8x8xbf16>, vector<8x16xbf16>, vector<8x16xf32> -> vector<8x16xf32>
      %42 = arith.addf %38, %41 : vector<8x16xf32>
      %c1_34 = arith.constant 1 : index
      %c0_35 = arith.constant 0 : index
      %c0_36 = arith.constant 0 : index
      %43 = vector.load %arg11[%c1_34, %c0_35, %c0_36] : memref<4x8x16xf32, #tpu.memory_space<vmem>>, vector<1x8x16xf32>
      %44 = vector.shape_cast %43 : vector<1x8x16xf32> to vector<8x16xf32>
      %45 = vector.shape_cast %42 : vector<8x16xf32> to vector<1x8x16xf32>
      tpu.vector_store %arg11[%c1_34, %c0_35, %c0_36], %45 {strides = array<i32>} : memref<4x8x16xf32, #tpu.memory_space<vmem>>, vector<1x8x16xf32>,
      %c1_37 = arith.constant 1 : index
      %c0_38 = arith.constant 0 : index
      %c0_39 = arith.constant 0 : index
      %46 = vector.load %arg12[%c1_37, %c0_38, %c0_39] : memref<4x8x16xf32, #tpu.memory_space<vmem>>, vector<1x8x16xf32>
      %47 = vector.shape_cast %46 : vector<1x8x16xf32> to vector<8x16xf32>
      %c0_40 = arith.constant 0 : index
      %c1_41 = arith.constant 1 : index
      %c0_42 = arith.constant 0 : index
      %c0_43 = arith.constant 0 : index
      %48 = vector.load %arg6[%c0_40, %c1_41, %c0_42, %c0_43] : memref<1x4x8x16xbf16, #tpu.memory_space<vmem>>, vector<1x1x8x16xbf16>
      %49 = vector.shape_cast %48 : vector<1x1x8x16xbf16> to vector<8x16xbf16>
      %cst_44 = arith.constant dense<0.000000e+00> : vector<8x16xf32>
      %50 = tpu.matmul %18, %49, %cst_44 {dimension_numbers = #tpu.dot_dimension_numbers<[1], [0], [0], [1], [0, 0, 1, 1], [], []>} : vector<8x8xbf16>, vector<8x16xbf16>, vector<8x16xf32> -> vector<8x16xf32>
      %51 = arith.addf %47, %50 : vector<8x16xf32>
      %c1_45 = arith.constant 1 : index
      %c0_46 = arith.constant 0 : index
      %c0_47 = arith.constant 0 : index
      %52 = vector.load %arg12[%c1_45, %c0_46, %c0_47] : memref<4x8x16xf32, #tpu.memory_space<vmem>>, vector<1x8x16xf32>
      %53 = vector.shape_cast %52 : vector<1x8x16xf32> to vector<8x16xf32>
      %54 = vector.shape_cast %51 : vector<8x16xf32> to vector<1x8x16xf32>
      tpu.vector_store %arg12[%c1_45, %c0_46, %c0_47], %54 {strides = array<i32>} : memref<4x8x16xf32, #tpu.memory_space<vmem>>, vector<1x8x16xf32>,
      %c2 = arith.constant 2 : index
      %c0_48 = arith.constant 0 : index
      %c0_49 = arith.constant 0 : index
      %55 = vector.load %arg11[%c2, %c0_48, %c0_49] : memref<4x8x16xf32, #tpu.memory_space<vmem>>, vector<1x8x16xf32>
      %56 = vector.shape_cast %55 : vector<1x8x16xf32> to vector<8x16xf32>
      %c0_50 = arith.constant 0 : index
      %c2_51 = arith.constant 2 : index
      %c0_52 = arith.constant 0 : index
      %c0_53 = arith.constant 0 : index
      %57 = vector.load %arg3[%c0_50, %c2_51, %c0_52, %c0_53] : memref<1x4x8x16xbf16, #tpu.memory_space<vmem>>, vector<1x1x8x16xbf16>
      %58 = vector.shape_cast %57 : vector<1x1x8x16xbf16> to vector<8x16xbf16>
      %cst_54 = arith.constant dense<0.000000e+00> : vector<8x16xf32>
      %59 = tpu.matmul %15, %58, %cst_54 {dimension_numbers = #tpu.dot_dimension_numbers<[1], [0], [0], [1], [0, 0, 1, 1], [], []>} : vector<8x8xbf16>, vector<8x16xbf16>, vector<8x16xf32> -> vector<8x16xf32>
      %60 = arith.addf %56, %59 : vector<8x16xf32>
      %c2_55 = arith.constant 2 : index
      %c0_56 = arith.constant 0 : index
      %c0_57 = arith.constant 0 : index
      %61 = vector.load %arg11[%c2_55, %c0_56, %c0_57] : memref<4x8x16xf32, #tpu.memory_space<vmem>>, vector<1x8x16xf32>
      %62 = vector.shape_cast %61 : vector<1x8x16xf32> to vector<8x16xf32>
      %63 = vector.shape_cast %60 : vector<8x16xf32> to vector<1x8x16xf32>
      tpu.vector_store %arg11[%c2_55, %c0_56, %c0_57], %63 {strides = array<i32>} : memref<4x8x16xf32, #tpu.memory_space<vmem>>, vector<1x8x16xf32>,
      %c2_58 = arith.constant 2 : index
      %c0_59 = arith.constant 0 : index
      %c0_60 = arith.constant 0 : index
      %64 = vector.load %arg12[%c2_58, %c0_59, %c0_60] : memref<4x8x16xf32, #tpu.memory_space<vmem>>, vector<1x8x16xf32>
      %65 = vector.shape_cast %64 : vector<1x8x16xf32> to vector<8x16xf32>
      %c0_61 = arith.constant 0 : index
      %c2_62 = arith.constant 2 : index
      %c0_63 = arith.constant 0 : index
      %c0_64 = arith.constant 0 : index
      %66 = vector.load %arg6[%c0_61, %c2_62, %c0_63, %c0_64] : memref<1x4x8x16xbf16, #tpu.memory_space<vmem>>, vector<1x1x8x16xbf16>
      %67 = vector.shape_cast %66 : vector<1x1x8x16xbf16> to vector<8x16xbf16>
      %cst_65 = arith.constant dense<0.000000e+00> : vector<8x16xf32>
      %68 = tpu.matmul %18, %67, %cst_65 {dimension_numbers = #tpu.dot_dimension_numbers<[1], [0], [0], [1], [0, 0, 1, 1], [], []>} : vector<8x8xbf16>, vector<8x16xbf16>, vector<8x16xf32> -> vector<8x16xf32>
      %69 = arith.addf %65, %68 : vector<8x16xf32>
      %c2_66 = arith.constant 2 : index
      %c0_67 = arith.constant 0 : index
      %c0_68 = arith.constant 0 : index
      %70 = vector.load %arg12[%c2_66, %c0_67, %c0_68] : memref<4x8x16xf32, #tpu.memory_space<vmem>>, vector<1x8x16xf32>
      %71 = vector.shape_cast %70 : vector<1x8x16xf32> to vector<8x16xf32>
      %72 = vector.shape_cast %69 : vector<8x16xf32> to vector<1x8x16xf32>
      tpu.vector_store %arg12[%c2_66, %c0_67, %c0_68], %72 {strides = array<i32>} : memref<4x8x16xf32, #tpu.memory_space<vmem>>, vector<1x8x16xf32>,
      %c3 = arith.constant 3 : index
      %c0_69 = arith.constant 0 : index
      %c0_70 = arith.constant 0 : index
      %73 = vector.load %arg11[%c3, %c0_69, %c0_70] : memref<4x8x16xf32, #tpu.memory_space<vmem>>, vector<1x8x16xf32>
      %74 = vector.shape_cast %73 : vector<1x8x16xf32> to vector<8x16xf32>
      %c0_71 = arith.constant 0 : index
      %c3_72 = arith.constant 3 : index
      %c0_73 = arith.constant 0 : index
      %c0_74 = arith.constant 0 : index
      %75 = vector.load %arg3[%c0_71, %c3_72, %c0_73, %c0_74] : memref<1x4x8x16xbf16, #tpu.memory_space<vmem>>, vector<1x1x8x16xbf16>
      %76 = vector.shape_cast %75 : vector<1x1x8x16xbf16> to vector<8x16xbf16>
      %cst_75 = arith.constant dense<0.000000e+00> : vector<8x16xf32>
      %77 = tpu.matmul %15, %76, %cst_75 {dimension_numbers = #tpu.dot_dimension_numbers<[1], [0], [0], [1], [0, 0, 1, 1], [], []>} : vector<8x8xbf16>, vector<8x16xbf16>, vector<8x16xf32> -> vector<8x16xf32>
      %78 = arith.addf %74, %77 : vector<8x16xf32>
      %c3_76 = arith.constant 3 : index
      %c0_77 = arith.constant 0 : index
      %c0_78 = arith.constant 0 : index
      %79 = vector.load %arg11[%c3_76, %c0_77, %c0_78] : memref<4x8x16xf32, #tpu.memory_space<vmem>>, vector<1x8x16xf32>
      %80 = vector.shape_cast %79 : vector<1x8x16xf32> to vector<8x16xf32>
      %81 = vector.shape_cast %78 : vector<8x16xf32> to vector<1x8x16xf32>
      tpu.vector_store %arg11[%c3_76, %c0_77, %c0_78], %81 {strides = array<i32>} : memref<4x8x16xf32, #tpu.memory_space<vmem>>, vector<1x8x16xf32>,
      %c3_79 = arith.constant 3 : index
      %c0_80 = arith.constant 0 : index
      %c0_81 = arith.constant 0 : index
      %82 = vector.load %arg12[%c3_79, %c0_80, %c0_81] : memref<4x8x16xf32, #tpu.memory_space<vmem>>, vector<1x8x16xf32>
      %83 = vector.shape_cast %82 : vector<1x8x16xf32> to vector<8x16xf32>
      %c0_82 = arith.constant 0 : index
      %c3_83 = arith.constant 3 : index
      %c0_84 = arith.constant 0 : index
      %c0_85 = arith.constant 0 : index
      %84 = vector.load %arg6[%c0_82, %c3_83, %c0_84, %c0_85] : memref<1x4x8x16xbf16, #tpu.memory_space<vmem>>, vector<1x1x8x16xbf16>
      %85 = vector.shape_cast %84 : vector<1x1x8x16xbf16> to vector<8x16xbf16>
      %cst_86 = arith.constant dense<0.000000e+00> : vector<8x16xf32>
      %86 = tpu.matmul %18, %85, %cst_86 {dimension_numbers = #tpu.dot_dimension_numbers<[1], [0], [0], [1], [0, 0, 1, 1], [], []>} : vector<8x8xbf16>, vector<8x16xbf16>, vector<8x16xf32> -> vector<8x16xf32>
      %87 = arith.addf %83, %86 : vector<8x16xf32>
      %c3_87 = arith.constant 3 : index
      %c0_88 = arith.constant 0 : index
      %c0_89 = arith.constant 0 : index
      %88 = vector.load %arg12[%c3_87, %c0_88, %c0_89] : memref<4x8x16xf32, #tpu.memory_space<vmem>>, vector<1x8x16xf32>
      %89 = vector.shape_cast %88 : vector<1x8x16xf32> to vector<8x16xf32>
      %90 = vector.shape_cast %87 : vector<8x16xf32> to vector<1x8x16xf32>
      tpu.vector_store %arg12[%c3_87, %c0_88, %c0_89], %90 {strides = array<i32>} : memref<4x8x16xf32, #tpu.memory_space<vmem>>, vector<1x8x16xf32>,
    } else {
    }
    %c1_i32 = arith.constant 1 : i32
    %10 = arith.cmpi eq, %arg1, %c1_i32 : i32
    %11 = arith.extui %10 : i1 to i32
    %c0_i32_2 = arith.constant 0 : i32
    %12 = arith.cmpi ne, %11, %c0_i32_2 : i32
    scf.if %12 {
      %c0 = arith.constant 0 : index
      %c0_3 = arith.constant 0 : index
      %13 = vector.load %arg5[%c0, %c0_3] : memref<16x8xbf16, #tpu.memory_space<vmem>>, vector<16x8xbf16>
      %c0_4 = arith.constant 0 : index
      %c0_5 = arith.constant 0 : index
      %14 = vector.load %arg8[%c0_4, %c0_5] : memref<16x8xbf16, #tpu.memory_space<vmem>>, vector<16x8xbf16>
      %c0_6 = arith.constant 0 : index
      %c0_7 = arith.constant 0 : index
      %c0_8 = arith.constant 0 : index
      %15 = vector.load %arg11[%c0_6, %c0_7, %c0_8] : memref<4x8x16xf32, #tpu.memory_space<vmem>>, vector<1x8x16xf32>
      %16 = vector.shape_cast %15 : vector<1x8x16xf32> to vector<8x16xf32>
      %17 = arith.truncf %16 : vector<8x16xf32> to vector<8x16xbf16>
      %cst = arith.constant dense<0.000000e+00> : vector<8x8xf32>
      %18 = tpu.matmul %17, %13, %cst {dimension_numbers = #tpu.dot_dimension_numbers<[1], [0], [0], [1], [0, 0, 1, 1], [], []>} : vector<8x16xbf16>, vector<16x8xbf16>, vector<8x8xf32> -> vector<8x8xf32>
      %c0_9 = arith.constant 0 : index
      %c0_10 = arith.constant 0 : index
      %c0_11 = arith.constant 0 : index
      %19 = vector.load %arg12[%c0_9, %c0_10, %c0_11] : memref<4x8x16xf32, #tpu.memory_space<vmem>>, vector<1x8x16xf32>
      %20 = vector.shape_cast %19 : vector<1x8x16xf32> to vector<8x16xf32>
      %21 = arith.truncf %20 : vector<8x16xf32> to vector<8x16xbf16>
      %cst_12 = arith.constant dense<0.000000e+00> : vector<8x8xf32>
      %22 = tpu.matmul %21, %14, %cst_12 {dimension_numbers = #tpu.dot_dimension_numbers<[1], [0], [0], [1], [0, 0, 1, 1], [], []>} : vector<8x16xbf16>, vector<16x8xbf16>, vector<8x8xf32> -> vector<8x8xf32>
      %c0_13 = arith.constant 0 : index
      %c0_14 = arith.constant 0 : index
      %c0_15 = arith.constant 0 : index
      %c0_16 = arith.constant 0 : index
      %23 = vector.load %arg9[%c0_13, %c0_14, %c0_15, %c0_16] : memref<1x4x8x8xf32, #tpu.memory_space<vmem>>, vector<1x1x8x8xf32>
      %24 = vector.shape_cast %23 : vector<1x1x8x8xf32> to vector<8x8xf32>
      %25 = vector.shape_cast %18 : vector<8x8xf32> to vector<1x1x8x8xf32>
      tpu.vector_store %arg9[%c0_13, %c0_14, %c0_15, %c0_16], %25 {strides = array<i32>} : memref<1x4x8x8xf32, #tpu.memory_space<vmem>>, vector<1x1x8x8xf32>,
      %c0_17 = arith.constant 0 : index
      %c0_18 = arith.constant 0 : index
      %c0_19 = arith.constant 0 : index
      %c0_20 = arith.constant 0 : index
      %26 = vector.load %arg10[%c0_17, %c0_18, %c0_19, %c0_20] : memref<1x4x8x8xf32, #tpu.memory_space<vmem>>, vector<1x1x8x8xf32>
      %27 = vector.shape_cast %26 : vector<1x1x8x8xf32> to vector<8x8xf32>
      %28 = vector.shape_cast %22 : vector<8x8xf32> to vector<1x1x8x8xf32>
      tpu.vector_store %arg10[%c0_17, %c0_18, %c0_19, %c0_20], %28 {strides = array<i32>} : memref<1x4x8x8xf32, #tpu.memory_space<vmem>>, vector<1x1x8x8xf32>,
      %c1 = arith.constant 1 : index
      %c0_21 = arith.constant 0 : index
      %c0_22 = arith.constant 0 : index
      %29 = vector.load %arg11[%c1, %c0_21, %c0_22] : memref<4x8x16xf32, #tpu.memory_space<vmem>>, vector<1x8x16xf32>
      %30 = vector.shape_cast %29 : vector<1x8x16xf32> to vector<8x16xf32>
      %31 = arith.truncf %30 : vector<8x16xf32> to vector<8x16xbf16>
      %cst_23 = arith.constant dense<0.000000e+00> : vector<8x8xf32>
      %32 = tpu.matmul %31, %13, %cst_23 {dimension_numbers = #tpu.dot_dimension_numbers<[1], [0], [0], [1], [0, 0, 1, 1], [], []>} : vector<8x16xbf16>, vector<16x8xbf16>, vector<8x8xf32> -> vector<8x8xf32>
      %c1_24 = arith.constant 1 : index
      %c0_25 = arith.constant 0 : index
      %c0_26 = arith.constant 0 : index
      %33 = vector.load %arg12[%c1_24, %c0_25, %c0_26] : memref<4x8x16xf32, #tpu.memory_space<vmem>>, vector<1x8x16xf32>
      %34 = vector.shape_cast %33 : vector<1x8x16xf32> to vector<8x16xf32>
      %35 = arith.truncf %34 : vector<8x16xf32> to vector<8x16xbf16>
      %cst_27 = arith.constant dense<0.000000e+00> : vector<8x8xf32>
      %36 = tpu.matmul %35, %14, %cst_27 {dimension_numbers = #tpu.dot_dimension_numbers<[1], [0], [0], [1], [0, 0, 1, 1], [], []>} : vector<8x16xbf16>, vector<16x8xbf16>, vector<8x8xf32> -> vector<8x8xf32>
      %c0_28 = arith.constant 0 : index
      %c1_29 = arith.constant 1 : index
      %c0_30 = arith.constant 0 : index
      %c0_31 = arith.constant 0 : index
      %37 = vector.load %arg9[%c0_28, %c1_29, %c0_30, %c0_31] : memref<1x4x8x8xf32, #tpu.memory_space<vmem>>, vector<1x1x8x8xf32>
      %38 = vector.shape_cast %37 : vector<1x1x8x8xf32> to vector<8x8xf32>
      %39 = vector.shape_cast %32 : vector<8x8xf32> to vector<1x1x8x8xf32>
      tpu.vector_store %arg9[%c0_28, %c1_29, %c0_30, %c0_31], %39 {strides = array<i32>} : memref<1x4x8x8xf32, #tpu.memory_space<vmem>>, vector<1x1x8x8xf32>,
      %c0_32 = arith.constant 0 : index
      %c1_33 = arith.constant 1 : index
      %c0_34 = arith.constant 0 : index
      %c0_35 = arith.constant 0 : index
      %40 = vector.load %arg10[%c0_32, %c1_33, %c0_34, %c0_35] : memref<1x4x8x8xf32, #tpu.memory_space<vmem>>, vector<1x1x8x8xf32>
      %41 = vector.shape_cast %40 : vector<1x1x8x8xf32> to vector<8x8xf32>
      %42 = vector.shape_cast %36 : vector<8x8xf32> to vector<1x1x8x8xf32>
      tpu.vector_store %arg10[%c0_32, %c1_33, %c0_34, %c0_35], %42 {strides = array<i32>} : memref<1x4x8x8xf32, #tpu.memory_space<vmem>>, vector<1x1x8x8xf32>,
      %c2 = arith.constant 2 : index
      %c0_36 = arith.constant 0 : index
      %c0_37 = arith.constant 0 : index
      %43 = vector.load %arg11[%c2, %c0_36, %c0_37] : memref<4x8x16xf32, #tpu.memory_space<vmem>>, vector<1x8x16xf32>
      %44 = vector.shape_cast %43 : vector<1x8x16xf32> to vector<8x16xf32>
      %45 = arith.truncf %44 : vector<8x16xf32> to vector<8x16xbf16>
      %cst_38 = arith.constant dense<0.000000e+00> : vector<8x8xf32>
      %46 = tpu.matmul %45, %13, %cst_38 {dimension_numbers = #tpu.dot_dimension_numbers<[1], [0], [0], [1], [0, 0, 1, 1], [], []>} : vector<8x16xbf16>, vector<16x8xbf16>, vector<8x8xf32> -> vector<8x8xf32>
      %c2_39 = arith.constant 2 : index
      %c0_40 = arith.constant 0 : index
      %c0_41 = arith.constant 0 : index
      %47 = vector.load %arg12[%c2_39, %c0_40, %c0_41] : memref<4x8x16xf32, #tpu.memory_space<vmem>>, vector<1x8x16xf32>
      %48 = vector.shape_cast %47 : vector<1x8x16xf32> to vector<8x16xf32>
      %49 = arith.truncf %48 : vector<8x16xf32> to vector<8x16xbf16>
      %cst_42 = arith.constant dense<0.000000e+00> : vector<8x8xf32>
      %50 = tpu.matmul %49, %14, %cst_42 {dimension_numbers = #tpu.dot_dimension_numbers<[1], [0], [0], [1], [0, 0, 1, 1], [], []>} : vector<8x16xbf16>, vector<16x8xbf16>, vector<8x8xf32> -> vector<8x8xf32>
      %c0_43 = arith.constant 0 : index
      %c2_44 = arith.constant 2 : index
      %c0_45 = arith.constant 0 : index
      %c0_46 = arith.constant 0 : index
      %51 = vector.load %arg9[%c0_43, %c2_44, %c0_45, %c0_46] : memref<1x4x8x8xf32, #tpu.memory_space<vmem>>, vector<1x1x8x8xf32>
      %52 = vector.shape_cast %51 : vector<1x1x8x8xf32> to vector<8x8xf32>
      %53 = vector.shape_cast %46 : vector<8x8xf32> to vector<1x1x8x8xf32>
      tpu.vector_store %arg9[%c0_43, %c2_44, %c0_45, %c0_46], %53 {strides = array<i32>} : memref<1x4x8x8xf32, #tpu.memory_space<vmem>>, vector<1x1x8x8xf32>,
      %c0_47 = arith.constant 0 : index
      %c2_48 = arith.constant 2 : index
      %c0_49 = arith.constant 0 : index
      %c0_50 = arith.constant 0 : index
      %54 = vector.load %arg10[%c0_47, %c2_48, %c0_49, %c0_50] : memref<1x4x8x8xf32, #tpu.memory_space<vmem>>, vector<1x1x8x8xf32>
      %55 = vector.shape_cast %54 : vector<1x1x8x8xf32> to vector<8x8xf32>
      %56 = vector.shape_cast %50 : vector<8x8xf32> to vector<1x1x8x8xf32>
      tpu.vector_store %arg10[%c0_47, %c2_48, %c0_49, %c0_50], %56 {strides = array<i32>} : memref<1x4x8x8xf32, #tpu.memory_space<vmem>>, vector<1x1x8x8xf32>,
      %c3 = arith.constant 3 : index
      %c0_51 = arith.constant 0 : index
      %c0_52 = arith.constant 0 : index
      %57 = vector.load %arg11[%c3, %c0_51, %c0_52] : memref<4x8x16xf32, #tpu.memory_space<vmem>>, vector<1x8x16xf32>
      %58 = vector.shape_cast %57 : vector<1x8x16xf32> to vector<8x16xf32>
      %59 = arith.truncf %58 : vector<8x16xf32> to vector<8x16xbf16>
      %cst_53 = arith.constant dense<0.000000e+00> : vector<8x8xf32>
      %60 = tpu.matmul %59, %13, %cst_53 {dimension_numbers = #tpu.dot_dimension_numbers<[1], [0], [0], [1], [0, 0, 1, 1], [], []>} : vector<8x16xbf16>, vector<16x8xbf16>, vector<8x8xf32> -> vector<8x8xf32>
      %c3_54 = arith.constant 3 : index
      %c0_55 = arith.constant 0 : index
      %c0_56 = arith.constant 0 : index
      %61 = vector.load %arg12[%c3_54, %c0_55, %c0_56] : memref<4x8x16xf32, #tpu.memory_space<vmem>>, vector<1x8x16xf32>
      %62 = vector.shape_cast %61 : vector<1x8x16xf32> to vector<8x16xf32>
      %63 = arith.truncf %62 : vector<8x16xf32> to vector<8x16xbf16>
      %cst_57 = arith.constant dense<0.000000e+00> : vector<8x8xf32>
      %64 = tpu.matmul %63, %14, %cst_57 {dimension_numbers = #tpu.dot_dimension_numbers<[1], [0], [0], [1], [0, 0, 1, 1], [], []>} : vector<8x16xbf16>, vector<16x8xbf16>, vector<8x8xf32> -> vector<8x8xf32>
      %c0_58 = arith.constant 0 : index
      %c3_59 = arith.constant 3 : index
      %c0_60 = arith.constant 0 : index
      %c0_61 = arith.constant 0 : index
      %65 = vector.load %arg9[%c0_58, %c3_59, %c0_60, %c0_61] : memref<1x4x8x8xf32, #tpu.memory_space<vmem>>, vector<1x1x8x8xf32>
      %66 = vector.shape_cast %65 : vector<1x1x8x8xf32> to vector<8x8xf32>
      %67 = vector.shape_cast %60 : vector<8x8xf32> to vector<1x1x8x8xf32>
      tpu.vector_store %arg9[%c0_58, %c3_59, %c0_60, %c0_61], %67 {strides = array<i32>} : memref<1x4x8x8xf32, #tpu.memory_space<vmem>>, vector<1x1x8x8xf32>,
      %c0_62 = arith.constant 0 : index
      %c3_63 = arith.constant 3 : index
      %c0_64 = arith.constant 0 : index
      %c0_65 = arith.constant 0 : index
      %68 = vector.load %arg10[%c0_62, %c3_63, %c0_64, %c0_65] : memref<1x4x8x8xf32, #tpu.memory_space<vmem>>, vector<1x1x8x8xf32>
      %69 = vector.shape_cast %68 : vector<1x1x8x8xf32> to vector<8x8xf32>
      %70 = vector.shape_cast %64 : vector<8x8xf32> to vector<1x1x8x8xf32>
      tpu.vector_store %arg10[%c0_62, %c3_63, %c0_64, %c0_65], %70 {strides = array<i32>} : memref<1x4x8x8xf32, #tpu.memory_space<vmem>>, vector<1x1x8x8xf32>,
    } else {
    }
    return
  }
  func.func @transform_0(%arg0: i32, %arg1: i32, %arg2: memref<6xi32, #tpu.memory_space<smem>>) -> (i32, i32, i32, i32) {
    %c4 = arith.constant 4 : index
    %0 = memref.load %arg2[%c4] : memref<6xi32, #tpu.memory_space<smem>>
    %c5 = arith.constant 5 : index
    %1 = memref.load %arg2[%c5] : memref<6xi32, #tpu.memory_space<smem>>
    %2 = arith.maxsi %0, %arg1 : i32
    %3 = arith.minsi %1, %2 : i32
    %c0_i32 = arith.constant 0 : i32
    %c0_i32_0 = arith.constant 0 : i32
    %c0_i32_1 = arith.constant 0 : i32
    return %arg0, %c0_i32, %3, %c0_i32_0 : i32, i32, i32, i32
  }
  func.func @transform_1(%arg0: i32, %arg1: i32, %arg2: memref<6xi32, #tpu.memory_space<smem>>) -> (i32, i32, i32) {
    %c0_i32 = arith.constant 0 : i32
    %c0_i32_0 = arith.constant 0 : i32
    %c0_i32_1 = arith.constant 0 : i32
    %c0_i32_2 = arith.constant 0 : i32
    return %c0_i32, %c0_i32_0, %c0_i32_1 : i32, i32, i32
  }
  func.func @transform_2(%arg0: i32, %arg1: i32, %arg2: memref<6xi32, #tpu.memory_space<smem>>) -> (i32, i32) {
    %c0_i32 = arith.constant 0 : i32
    %c0_i32_0 = arith.constant 0 : i32
    %c0_i32_1 = arith.constant 0 : i32
    return %c0_i32, %c0_i32_0 : i32, i32
  }
  func.func @transform_3(%arg0: i32, %arg1: i32, %arg2: memref<6xi32, #tpu.memory_space<smem>>) -> (i32, i32, i32, i32) {
    %c4 = arith.constant 4 : index
    %0 = memref.load %arg2[%c4] : memref<6xi32, #tpu.memory_space<smem>>
    %c5 = arith.constant 5 : index
    %1 = memref.load %arg2[%c5] : memref<6xi32, #tpu.memory_space<smem>>
    %2 = arith.maxsi %0, %arg1 : i32
    %3 = arith.minsi %1, %2 : i32
    %c0_i32 = arith.constant 0 : i32
    %c0_i32_0 = arith.constant 0 : i32
    %c0_i32_1 = arith.constant 0 : i32
    return %arg0, %c0_i32, %3, %c0_i32_0 : i32, i32, i32, i32
  }
  func.func @transform_4(%arg0: i32, %arg1: i32, %arg2: memref<6xi32, #tpu.memory_space<smem>>) -> (i32, i32, i32) {
    %c0_i32 = arith.constant 0 : i32
    %c0_i32_0 = arith.constant 0 : i32
    %c0_i32_1 = arith.constant 0 : i32
    %c0_i32_2 = arith.constant 0 : i32
    return %c0_i32, %c0_i32_0, %c0_i32_1 : i32, i32, i32
  }
  func.func @transform_5(%arg0: i32, %arg1: i32, %arg2: memref<6xi32, #tpu.memory_space<smem>>) -> (i32, i32) {
    %c0_i32 = arith.constant 0 : i32
    %c0_i32_0 = arith.constant 0 : i32
    %c0_i32_1 = arith.constant 0 : i32
    return %c0_i32, %c0_i32_0 : i32, i32
  }
  func.func @transform_6(%arg0: i32, %arg1: i32, %arg2: memref<6xi32, #tpu.memory_space<smem>>) -> (i32, i32, i32, i32) {
    %c0_i32 = arith.constant 0 : i32
    %c0_i32_0 = arith.constant 0 : i32
    %c0_i32_1 = arith.constant 0 : i32
    %c0_i32_2 = arith.constant 0 : i32
    return %arg0, %c0_i32, %c0_i32_0, %c0_i32_1 : i32, i32, i32, i32
  }
  func.func @transform_7(%arg0: i32, %arg1: i32, %arg2: memref<6xi32, #tpu.memory_space<smem>>) -> (i32, i32, i32, i32) {
    %c0_i32 = arith.constant 0 : i32
    %c0_i32_0 = arith.constant 0 : i32
    %c0_i32_1 = arith.constant 0 : i32
    %c0_i32_2 = arith.constant 0 : i32
    return %arg0, %c0_i32, %c0_i32_0, %c0_i32_1 : i32, i32, i32, i32
  }
}

</mosaic_0001>

<llo_original>
// kernel: random_resized_crop_seg.1
$region0: #{random_resized_crop_seg.1}
  #allocation0 [shape = 'u32[]', space=smem, size = 0x4, offset = 0x4, fixed_abs, tag = 'smem constant byte address 0x4 - core index']
  #allocation1 [shape = 'u32[72,128]{1,0:T(1,128)}', space=vmem, size = 0x9000, scoped, tag = 'internal scratch']
  #allocation2 [shape = 'f32[4,8,16]{2,1,0:T(8,128)}', space=vmem, size = 0x4000, scoped, tag = 'scratch operand']
  #allocation3 [shape = 'f32[4,8,16]{2,1,0:T(8,128)}', space=vmem, size = 0x4000, scoped, tag = 'scratch operand']
  #allocation4 [shape = 's32[1]{0}', space=sflag, size = 0x4, scoped, tag = 'scoped memory for random_resized_crop_seg.1']
  #allocation5 [shape = 'u8[512]{0}', space=smem, size = 0x200, scoped, tag = 'prefetched SMEM operand 0']
  %s0 = inlined_call_operand.vmem [shape: s32[6], index: 0, kind: input, shape index: {}]
  %s1 = inlined_call_operand.vmem [shape: bf16[2,4,16,16], index: 1, kind: input, shape index: {}]
  %s2 = inlined_call_operand.vmem [shape: bf16[2,8,8], index: 2, kind: input, shape index: {}]
  %s3 = inlined_call_operand.vmem [shape: bf16[16,8], index: 3, kind: input, shape index: {}]
  %s4 = inlined_call_operand.vmem [shape: bf16[2,4,16,16], index: 4, kind: input, shape index: {}]
  %s5 = inlined_call_operand.vmem [shape: bf16[2,8,8], index: 5, kind: input, shape index: {}]
  %s6 = inlined_call_operand.vmem [shape: bf16[16,8], index: 6, kind: input, shape index: {}]
  %s7 = inlined_call_operand.hbm [shape: f32[2,4,8,8], index: 7, kind: output, shape index: {0}]
  %s8 = inlined_call_operand.hbm [shape: f32[2,4,8,8], index: 8, kind: output, shape index: {1}]
  %9 = xla_tuple %s7, %s8
  %s10 = sld [smem:[#allocation0]]
  $region159: #{random_resized_crop_seg.1} parent=0
    _
  %s12 = ssub.s32 1, %s10
  %s13 = scalar_select 0, %s12, %s10
  %s15 = sshll.u32 %s0, 4
  %s16 = int_to_ptr.vmem [resolvable:$true] %s15
  %18 = dma.vmem_to_smem %s16, 16, [#allocation5], [#allocation4]
  %20 = dma.done [#allocation4], 16
  %21 = sfence
  $region1: #{random_resized_crop_seg.1} parent=0
    #allocation6 [shape = 'u8[16384]{0}', space=vmem, size = 0x4000, scoped, tag = 'input window, operand 1']
    #allocation7 [shape = 'u8[16384]{0}', space=vmem, size = 0x4000, scoped, tag = 'input window, operand 4']
    #allocation8 [shape = 'u8[32768]{0}', space=vmem, size = 0x8000, scoped, tag = 'output window, operand 0']
    #allocation9 [shape = 's32[2]{0}', space=sflag, size = 0x8, scoped, tag = 'scoped memory for random_resized_crop_seg.1']
    #allocation10 [shape = 'u8[32768]{0}', space=vmem, size = 0x8000, scoped, tag = 'output window, operand 1']
    #allocation11 [shape = 's32[2]{0}', space=sflag, size = 0x8, scoped, tag = 'scoped memory for random_resized_crop_seg.1']
    %22 = vsyncpa [#allocation9], 0
    %s23 = scalar_lea.sflag [#allocation9], 1
    %24 = vsyncpa %s23, 0
    %25 = vsyncpa [#allocation11], 0
    %s26 = scalar_lea.sflag [#allocation11], 1
    %27 = vsyncpa %s26, 0
    loop: start=0, step=1, limit=6
    $region2: #{random_resized_crop_seg.1} parent=1 // loop_pre_header
      _
    $region3: #{random_resized_crop_seg.1} parent=1 // loop_header
      %s29 = sphi 0, %s33
      %p30 = scmp.ge.s32.totalorder %s29, 6
      %s36 = sphi 0, %s48
      %s37 = sphi 0, %s44
      %s38 = sphi 0, %s36
      %s39 = sphi 0, %s37
      %s40 = sphi 0, %s38
      %s41 = sphi 0, %s39
      %s65 = sphi 0, %s67
      %s68 = sphi 0, %s65
      %s69 = sphi 0, %s68
      %s85 = sphi 0, %s69
      %s89 = sphi 0, %s89
      %s91 = sphi 0, %s89
      %s92 = sphi 0, %s91
      %s106 = sphi 0, %s92
      %s110 = sphi 0, %s110
      %s112 = sphi 0, %s110
      %s113 = sphi 0, %s112
      %s127 = sphi 0, %s113
      %s147 = sphi 0, %s149
      %s150 = sphi 0, %s147
      %s151 = sphi 0, %s150
      %s167 = sphi 0, %s151
      %s171 = sphi 0, %s171
      %s173 = sphi 0, %s171
      %s174 = sphi 0, %s173
      %s188 = sphi 0, %s174
      %s192 = sphi 0, %s192
      %s194 = sphi 0, %s192
      %s195 = sphi 0, %s194
      %s209 = sphi 0, %s195
      %s215 = sphi 0, %s217
      %s218 = sphi 0, %s215
      %s219 = sphi 0, %s218
      %s235 = sphi 0, %s219
      %s241 = sphi 0, %s243
      %s244 = sphi 0, %s241
      %s245 = sphi 0, %s244
      %s261 = sphi 0, %s245
    $region4: #{random_resized_crop_seg.1} parent=1 // loop_header_branch
      %32 = sbr.rel (%p30) target = $region8
    $region5: #{random_resized_crop_seg.1} parent=1 // loop_body
      %s34 = ssub.s32 %s29, 1
      %s35 = ssub.s32 %s29, 2
      %s42 = sadd.s32 1, %s37
      %p43 = scmp.ge.s32.totalorder %s42, 2
      %s44 = scalar_select %p43, 0, %s42
      %s45 = sadd.s32 1, %s36
      %s46 = scalar_select %p43, %s45, %s36
      %p47 = scmp.ge.s32.totalorder %s46, 2
      %s48 = scalar_select %p47, 0, %s46
      %s49 = sld [smem:[#allocation5 + $0x4]]
      %s50 = sld [smem:[#allocation5 + $0x5]]
      %p51 = scmp.gt.s32.totalorder %s49, %s37
      %s52 = scalar_select %p51, %s49, %s37
      %p53 = scmp.lt.s32.totalorder %s50, %s52
      %s54 = scalar_select %p53, %s50, %s52
      %s55 = sld [smem:[#allocation5 + $0x4]]
      %s56 = sld [smem:[#allocation5 + $0x5]]
      %p57 = scmp.gt.s32.totalorder %s55, %s44
      %s58 = scalar_select %p57, %s55, %s44
      %p59 = scmp.lt.s32.totalorder %s56, %s58
      %s60 = scalar_select %p59, %s56, %s58
      %s61 = ssub.s32 %s36, %s48
      %s62 = ssub.s32 %s54, %s60
      %s63 = sor.u32 %s61, %s62
      %p64 = scmp.eq.s32.totalorder %s63, 0
      %s66 = sadd.s32 %s65, 1
      %s67 = scalar_select %p64, %s65, %s66
      %p70 = pneg %p64
      %p71 = scmp.eq.s32.totalorder %s29, 3
      %p72 = por %p70, %p71
      %p73 = scmp.ne.s32.totalorder %s65, %s68
      %p74 = scmp.eq.s32.totalorder %s29, 0
      %p75 = por %p73, %p74
      %p76 = scmp.ne.s32.totalorder %s65, %s68
      %p77 = scmp.eq.s32.totalorder %s34, 3
      %p78 = por %p76, %p77
      %p79 = scmp.ne.s32.totalorder %s68, %s69
      %p80 = scmp.eq.s32.totalorder %s34, 0
      %p81 = por %p79, %p80
      %p82 = scmp.ne.s32.totalorder %s68, %s69
      %p83 = scmp.eq.s32.totalorder %s35, 3
      %p84 = por %p82, %p83
      %p86 = scmp.ne.s32.totalorder %s69, %s85
      %p87 = scmp.eq.s32.totalorder %s35, 0
      %p88 = por %p86, %p87
      %s90 = sadd.s32 %s89, 1
      %p93 = scmp.eq.s32.totalorder %s29, 3
      %p94 = scmp.ne.s32.totalorder %s89, %s91
      %p95 = scmp.eq.s32.totalorder %s29, 0
      %p96 = por %p94, %p95
      %p97 = scmp.ne.s32.totalorder %s89, %s91
      %p98 = scmp.eq.s32.totalorder %s34, 3
      %p99 = por %p97, %p98
      %p100 = scmp.ne.s32.totalorder %s91, %s92
      %p101 = scmp.eq.s32.totalorder %s34, 0
      %p102 = por %p100, %p101
      %p103 = scmp.ne.s32.totalorder %s91, %s92
      %p104 = scmp.eq.s32.totalorder %s35, 3
      %p105 = por %p103, %p104
      %p107 = scmp.ne.s32.totalorder %s92, %s106
      %p108 = scmp.eq.s32.totalorder %s35, 0
      %p109 = por %p107, %p108
      %s111 = sadd.s32 %s110, 1
      %p114 = scmp.eq.s32.totalorder %s29, 3
      %p115 = scmp.ne.s32.totalorder %s110, %s112
      %p116 = scmp.eq.s32.totalorder %s29, 0
      %p117 = por %p115, %p116
      %p118 = scmp.ne.s32.totalorder %s110, %s112
      %p119 = scmp.eq.s32.totalorder %s34, 3
      %p120 = por %p118, %p119
      %p121 = scmp.ne.s32.totalorder %s112, %s113
      %p122 = scmp.eq.s32.totalorder %s34, 0
      %p123 = por %p121, %p122
      %p124 = scmp.ne.s32.totalorder %s112, %s113
      %p125 = scmp.eq.s32.totalorder %s35, 3
      %p126 = por %p124, %p125
      %p128 = scmp.ne.s32.totalorder %s113, %s127
      %p129 = scmp.eq.s32.totalorder %s35, 0
      %p130 = por %p128, %p129
      %s131 = sld [smem:[#allocation5 + $0x4]]
      %s132 = sld [smem:[#allocation5 + $0x5]]
      %p133 = scmp.gt.s32.totalorder %s131, %s37
      %s134 = scalar_select %p133, %s131, %s37
      %p135 = scmp.lt.s32.totalorder %s132, %s134
      %s136 = scalar_select %p135, %s132, %s134
      %s137 = sld [smem:[#allocation5 + $0x4]]
      %s138 = sld [smem:[#allocation5 + $0x5]]
      %p139 = scmp.gt.s32.totalorder %s137, %s44
      %s140 = scalar_select %p139, %s137, %s44
      %p141 = scmp.lt.s32.totalorder %s138, %s140
      %s142 = scalar_select %p141, %s138, %s140
      %s143 = ssub.s32 %s36, %s48
      %s144 = ssub.s32 %s136, %s142
      %s145 = sor.u32 %s143, %s144
      %p146 = scmp.eq.s32.totalorder %s145, 0
      %s148 = sadd.s32 %s147, 1
      %s149 = scalar_select %p146, %s147, %s148
      %p152 = pneg %p146
      %p153 = scmp.eq.s32.totalorder %s29, 3
      %p154 = por %p152, %p153
      %p155 = scmp.ne.s32.totalorder %s147, %s150
      %p156 = scmp.eq.s32.totalorder %s29, 0
      %p157 = por %p155, %p156
      %p158 = scmp.ne.s32.totalorder %s147, %s150
      %p159 = scmp.eq.s32.totalorder %s34, 3
      %p160 = por %p158, %p159
      %p161 = scmp.ne.s32.totalorder %s150, %s151
      %p162 = scmp.eq.s32.totalorder %s34, 0
      %p163 = por %p161, %p162
      %p164 = scmp.ne.s32.totalorder %s150, %s151
      %p165 = scmp.eq.s32.totalorder %s35, 3
      %p166 = por %p164, %p165
      %p168 = scmp.ne.s32.totalorder %s151, %s167
      %p169 = scmp.eq.s32.totalorder %s35, 0
      %p170 = por %p168, %p169
      %s172 = sadd.s32 %s171, 1
      %p175 = scmp.eq.s32.totalorder %s29, 3
      %p176 = scmp.ne.s32.totalorder %s171, %s173
      %p177 = scmp.eq.s32.totalorder %s29, 0
      %p178 = por %p176, %p177
      %p179 = scmp.ne.s32.totalorder %s171, %s173
      %p180 = scmp.eq.s32.totalorder %s34, 3
      %p181 = por %p179, %p180
      %p182 = scmp.ne.s32.totalorder %s173, %s174
      %p183 = scmp.eq.s32.totalorder %s34, 0
      %p184 = por %p182, %p183
      %p185 = scmp.ne.s32.totalorder %s173, %s174
      %p186 = scmp.eq.s32.totalorder %s35, 3
      %p187 = por %p185, %p186
      %p189 = scmp.ne.s32.totalorder %s174, %s188
      %p190 = scmp.eq.s32.totalorder %s35, 0
      %p191 = por %p189, %p190
      %s193 = sadd.s32 %s192, 1
      %p196 = scmp.eq.s32.totalorder %s29, 3
      %p197 = scmp.ne.s32.totalorder %s192, %s194
      %p198 = scmp.eq.s32.totalorder %s29, 0
      %p199 = por %p197, %p198
      %p200 = scmp.ne.s32.totalorder %s192, %s194
      %p201 = scmp.eq.s32.totalorder %s34, 3
      %p202 = por %p200, %p201
      %p203 = scmp.ne.s32.totalorder %s194, %s195
      %p204 = scmp.eq.s32.totalorder %s34, 0
      %p205 = por %p203, %p204
      %p206 = scmp.ne.s32.totalorder %s194, %s195
      %p207 = scmp.eq.s32.totalorder %s35, 3
      %p208 = por %p206, %p207
      %p210 = scmp.ne.s32.totalorder %s195, %s209
      %p211 = scmp.eq.s32.totalorder %s35, 0
      %p212 = por %p210, %p211
      %s213 = ssub.s32 %s36, %s48
      %p214 = scmp.eq.s32.totalorder %s213, 0
      %s216 = sadd.s32 %s215, 1
      %s217 = scalar_select %p214, %s215, %s216
      %p220 = pneg %p214
      %p221 = scmp.eq.s32.totalorder %s29, 3
      %p222 = por %p220, %p221
      %p223 = scmp.ne.s32.totalorder %s215, %s218
      %p224 = scmp.eq.s32.totalorder %s29, 0
      %p225 = por %p223, %p224
      %p226 = scmp.ne.s32.totalorder %s215, %s218
      %p227 = scmp.eq.s32.totalorder %s34, 3
      %p228 = por %p226, %p227
      %p229 = scmp.ne.s32.totalorder %s218, %s219
      %p230 = scmp.eq.s32.totalorder %s34, 0
      %p231 = por %p229, %p230
      %p232 = scmp.ne.s32.totalorder %s218, %s219
      %p233 = scmp.eq.s32.totalorder %s35, 3
      %p234 = por %p232, %p233
      %p236 = scmp.ne.s32.totalorder %s219, %s235
      %p237 = scmp.eq.s32.totalorder %s35, 0
      %p238 = por %p236, %p237
      %s239 = ssub.s32 %s36, %s48
      %p240 = scmp.eq.s32.totalorder %s239, 0
      %s242 = sadd.s32 %s241, 1
      %s243 = scalar_select %p240, %s241, %s242
      %p246 = pneg %p240
      %p247 = scmp.eq.s32.totalorder %s29, 3
      %p248 = por %p246, %p247
      %p249 = scmp.ne.s32.totalorder %s241, %s244
      %p250 = scmp.eq.s32.totalorder %s29, 0
      %p251 = por %p249, %p250
      %p252 = scmp.ne.s32.totalorder %s241, %s244
      %p253 = scmp.eq.s32.totalorder %s34, 3
      %p254 = por %p252, %p253
      %p255 = scmp.ne.s32.totalorder %s244, %s245
      %p256 = scmp.eq.s32.totalorder %s34, 0
      %p257 = por %p255, %p256
      %p258 = scmp.ne.s32.totalorder %s244, %s245
      %p259 = scmp.eq.s32.totalorder %s35, 3
      %p260 = por %p258, %p259
      %p262 = scmp.ne.s32.totalorder %s245, %s261
      %p263 = scmp.eq.s32.totalorder %s35, 0
      %p264 = por %p262, %p263
      %p265 = scmp.le.s32.totalorder 1, %s29
      %p266 = scmp.lt.s32.totalorder %s29, 5
      %p267 = pnand %p265, %p266
      %p268 = pneg %p267
      // Predicated region
      $region9: #{random_resized_crop_seg.1} parent=5 // pred_check
        _
      $region10: #{random_resized_crop_seg.1} parent=5 // pred_check_branch
        %270 = sbr.rel (%p267) target = $region12
      $region11: #{random_resized_crop_seg.1} parent=5 // pred_region
        %s271 = ssub.s32 %s29, 1
        // Predicated region
        $region13: #{random_resized_crop_seg.1} parent=11 // pred_check
          %p272 = pneg %p102
        $region14: #{random_resized_crop_seg.1} parent=11 // pred_check_branch
          %274 = sbr.rel (%p272) target = $region16
        $region15: #{random_resized_crop_seg.1} parent=11 // pred_region
          _
        $region16: #{random_resized_crop_seg.1} parent=11 // pred_fallthru
          _
        // Predicated region
        $region17: #{random_resized_crop_seg.1} parent=11 // pred_check
          %p275 = pneg %p123
        $region18: #{random_resized_crop_seg.1} parent=11 // pred_check_branch
          %277 = sbr.rel (%p275) target = $region20
        $region19: #{random_resized_crop_seg.1} parent=11 // pred_region
          _
        $region20: #{random_resized_crop_seg.1} parent=11 // pred_fallthru
          _
        // Predicated region
        $region21: #{random_resized_crop_seg.1} parent=11 // pred_check
          %p278 = pneg %p184
        $region22: #{random_resized_crop_seg.1} parent=11 // pred_check_branch
          %280 = sbr.rel (%p278) target = $region24
        $region23: #{random_resized_crop_seg.1} parent=11 // pred_region
          _
        $region24: #{random_resized_crop_seg.1} parent=11 // pred_fallthru
          _
        // Predicated region
        $region25: #{random_resized_crop_seg.1} parent=11 // pred_check
          %p281 = pneg %p205
        $region26: #{random_resized_crop_seg.1} parent=11 // pred_check_branch
          %283 = sbr.rel (%p281) target = $region28
        $region27: #{random_resized_crop_seg.1} parent=11 // pred_region
          _
        $region28: #{random_resized_crop_seg.1} parent=11 // pred_fallthru
          _
      $region12: #{random_resized_crop_seg.1} parent=5 // pred_fallthru
        _
      %p284 = scmp.lt.s32.totalorder %s29, 4
      // Predicated region
      $region29: #{random_resized_crop_seg.1} parent=5 // pred_check
        %p285 = pneg %p284
      $region30: #{random_resized_crop_seg.1} parent=5 // pred_check_branch
        %287 = sbr.rel (%p285) target = $region32
      $region31: #{random_resized_crop_seg.1} parent=5 // pred_region
        // Predicated region
        $region33: #{random_resized_crop_seg.1} parent=31 // pred_check
          %p288 = pneg %p75
        $region34: #{random_resized_crop_seg.1} parent=31 // pred_check_branch
          %290 = sbr.rel (%p288) target = $region36
        $region35: #{random_resized_crop_seg.1} parent=31 // pred_region
          %s291 = sand.u32 %s65, 1
          %s292 = sand.u32 %s65, 1
          %s293 = smul.addr %s292, 16
          %s294 = scalar_lea.vmem [#allocation6], %s293
          %s295 = sld [smem:[#allocation5 + $0x4]]
          %s296 = sld [smem:[#allocation5 + $0x5]]
          %p297 = scmp.gt.s32.totalorder %s295, %s37
          %s298 = scalar_select %p297, %s295, %s37
          %p299 = scmp.lt.s32.totalorder %s296, %s298
          %s300 = scalar_select %p299, %s296, %s298
          %s301 = smul.addr %s36, 8
          %s302 = sadd.s32 %s300, %s301
          %s303 = smul.addr %s302, 4
          %s304 = scalar_lea.vmem %s1, %s303
          // Predicated region
          $region37: #{random_resized_crop_seg.1} parent=35 // pred_check
            _
          $region38: #{random_resized_crop_seg.1} parent=35 // pred_check_branch
            %306 = sbr.rel (0) target = $region40
          $region39: #{random_resized_crop_seg.1} parent=35 // pred_region
            // Predicated region
            $region41: #{random_resized_crop_seg.1} parent=39 // pred_check
              _
            $region42: #{random_resized_crop_seg.1} parent=39 // pred_check_branch
              %308 = sbr.rel target = $region44
            $region43: #{random_resized_crop_seg.1} parent=39 // pred_region
              // Predicated region
              $region56: #{random_resized_crop_seg.1} parent=43 // pred_check
                _
              $region57: #{random_resized_crop_seg.1} parent=43 // pred_check_branch
                %330 = sbr.rel (0) target = $region59
              $region58: #{random_resized_crop_seg.1} parent=43 // pred_region
                loop: start=0, step=1, limit=1
                $region60: #{random_resized_crop_seg.1} parent=58 // loop_pre_header
                  _
                $region61: #{random_resized_crop_seg.1} parent=58 // loop_header
                  %s332 = sphi 0, %s336
                  %p333 = scmp.ge.s32.totalorder %s332, 1
                  %s337 = sphi %s304, %s304
                  %s338 = sphi %s294, %s294
                $region62: #{random_resized_crop_seg.1} parent=58 // loop_header_branch
                  %335 = sbr.rel (%p333) target = $region66
                $region63: #{random_resized_crop_seg.1} parent=58 // loop_body
                  _
                $region64: #{random_resized_crop_seg.1} parent=58 // loop_footer
                  %s336 = sadd.s32 1, %s332
                $region65: #{random_resized_crop_seg.1} parent=58 // loop_footer_branch
                  %331 = sbr.rel target = $region61
                $region66: #{random_resized_crop_seg.1} parent=58 // loop_exit
                  _
                %s340 = ssub.s32 16, 1
                loop: start=0, step=1, limit=1
                $region67: #{random_resized_crop_seg.1} parent=58 // loop_pre_header
                  _
                $region68: #{random_resized_crop_seg.1} parent=58 // loop_header
                  %s342 = sphi 0, %s346
                  %p343 = scmp.ge.s32.totalorder %s342, 1
                  %s347 = sphi %s304, %s304
                  %s348 = sphi %s294, %s294
                $region69: #{random_resized_crop_seg.1} parent=58 // loop_header_branch
                  %345 = sbr.rel (%p343) target = $region73
                $region70: #{random_resized_crop_seg.1} parent=58 // loop_body
                  %v349 = vld [vmem:[%s347] sm:%s340]
                  %350 = vst [vmem:[%s348] sm:%s340] %v349
                  %v351 = vld [vmem:[%s347 + $0x8] sm:%s340]
                  %352 = vst [vmem:[%s348 + $0x4] sm:%s340] %v351
                  %v353 = vld [vmem:[%s347 + $0x10] sm:%s340]
                  %354 = vst [vmem:[%s348 + $0x8] sm:%s340] %v353
                  %v355 = vld [vmem:[%s347 + $0x18] sm:%s340]
                  %356 = vst [vmem:[%s348 + $0xc] sm:%s340] %v355
                $region71: #{random_resized_crop_seg.1} parent=58 // loop_footer
                  %s346 = sadd.s32 1, %s342
                $region72: #{random_resized_crop_seg.1} parent=58 // loop_footer_branch
                  %341 = sbr.rel target = $region68
                $region73: #{random_resized_crop_seg.1} parent=58 // loop_exit
                  _
              $region59: #{random_resized_crop_seg.1} parent=43 // pred_fallthru
                _
            $region44: #{random_resized_crop_seg.1} parent=39 // pred_fallthru
              _
            // Predicated region
            $region45: #{random_resized_crop_seg.1} parent=39 // pred_check
              _
            $region46: #{random_resized_crop_seg.1} parent=39 // pred_check_branch
              %310 = sbr.rel (0) target = $region48
            $region47: #{random_resized_crop_seg.1} parent=39 // pred_region
              %s312 = ssub.s32 16, 1
              loop: start=0, step=1, limit=1
              $region49: #{random_resized_crop_seg.1} parent=47 // loop_pre_header
                _
              $region50: #{random_resized_crop_seg.1} parent=47 // loop_header
                %s314 = sphi 0, %s318
                %p315 = scmp.ge.s32.totalorder %s314, 1
                %s319 = sphi %s304, %s304
                %s320 = sphi %s294, %s294
              $region51: #{random_resized_crop_seg.1} parent=47 // loop_header_branch
                %317 = sbr.rel (%p315) target = $region55
              $region52: #{random_resized_crop_seg.1} parent=47 // loop_body
                %v321 = vld [vmem:[%s319] sm:%s312]
                %322 = vst [vmem:[%s320] sm:%s312] %v321
                %v323 = vld [vmem:[%s319 + $0x8] sm:%s312]
                %324 = vst [vmem:[%s320 + $0x4] sm:%s312] %v323
                %v325 = vld [vmem:[%s319 + $0x10] sm:%s312]
                %326 = vst [vmem:[%s320 + $0x8] sm:%s312] %v325
                %v327 = vld [vmem:[%s319 + $0x18] sm:%s312]
                %328 = vst [vmem:[%s320 + $0xc] sm:%s312] %v327
              $region53: #{random_resized_crop_seg.1} parent=47 // loop_footer
                %s318 = sadd.s32 1, %s314
              $region54: #{random_resized_crop_seg.1} parent=47 // loop_footer_branch
                %313 = sbr.rel target = $region50
              $region55: #{random_resized_crop_seg.1} parent=47 // loop_exit
                _
            $region48: #{random_resized_crop_seg.1} parent=39 // pred_fallthru
              _
          $region40: #{random_resized_crop_seg.1} parent=35 // pred_fallthru
            _
          %357 = vnop
        $region36: #{random_resized_crop_seg.1} parent=31 // pred_fallthru
          _
        // Predicated region
        $region74: #{random_resized_crop_seg.1} parent=31 // pred_check
          %p358 = pneg %p157
        $region75: #{random_resized_crop_seg.1} parent=31 // pred_check_branch
          %360 = sbr.rel (%p358) target = $region77
        $region76: #{random_resized_crop_seg.1} parent=31 // pred_region
          %s361 = sand.u32 %s147, 1
          %s362 = sand.u32 %s147, 1
          %s363 = smul.addr %s362, 16
          %s364 = scalar_lea.vmem [#allocation7], %s363
          %s365 = sld [smem:[#allocation5 + $0x4]]
          %s366 = sld [smem:[#allocation5 + $0x5]]
          %p367 = scmp.gt.s32.totalorder %s365, %s37
          %s368 = scalar_select %p367, %s365, %s37
          %p369 = scmp.lt.s32.totalorder %s366, %s368
          %s370 = scalar_select %p369, %s366, %s368
          %s371 = smul.addr %s36, 8
          %s372 = sadd.s32 %s370, %s371
          %s373 = smul.addr %s372, 4
          %s374 = scalar_lea.vmem %s4, %s373
          // Predicated region
          $region78: #{random_resized_crop_seg.1} parent=76 // pred_check
            _
          $region79: #{random_resized_crop_seg.1} parent=76 // pred_check_branch
            %376 = sbr.rel (0) target = $region81
          $region80: #{random_resized_crop_seg.1} parent=76 // pred_region
            // Predicated region
            $region82: #{random_resized_crop_seg.1} parent=80 // pred_check
              _
            $region83: #{random_resized_crop_seg.1} parent=80 // pred_check_branch
              %378 = sbr.rel target = $region85
            $region84: #{random_resized_crop_seg.1} parent=80 // pred_region
              // Predicated region
              $region97: #{random_resized_crop_seg.1} parent=84 // pred_check
                _
              $region98: #{random_resized_crop_seg.1} parent=84 // pred_check_branch
                %400 = sbr.rel (0) target = $region100
              $region99: #{random_resized_crop_seg.1} parent=84 // pred_region
                loop: start=0, step=1, limit=1
                $region101: #{random_resized_crop_seg.1} parent=99 // loop_pre_header
                  _
                $region102: #{random_resized_crop_seg.1} parent=99 // loop_header
                  %s402 = sphi 0, %s406
                  %p403 = scmp.ge.s32.totalorder %s402, 1
                  %s407 = sphi %s374, %s374
                  %s408 = sphi %s364, %s364
                $region103: #{random_resized_crop_seg.1} parent=99 // loop_header_branch
                  %405 = sbr.rel (%p403) target = $region107
                $region104: #{random_resized_crop_seg.1} parent=99 // loop_body
                  _
                $region105: #{random_resized_crop_seg.1} parent=99 // loop_footer
                  %s406 = sadd.s32 1, %s402
                $region106: #{random_resized_crop_seg.1} parent=99 // loop_footer_branch
                  %401 = sbr.rel target = $region102
                $region107: #{random_resized_crop_seg.1} parent=99 // loop_exit
                  _
                %s410 = ssub.s32 16, 1
                loop: start=0, step=1, limit=1
                $region108: #{random_resized_crop_seg.1} parent=99 // loop_pre_header
                  _
                $region109: #{random_resized_crop_seg.1} parent=99 // loop_header
                  %s412 = sphi 0, %s416
                  %p413 = scmp.ge.s32.totalorder %s412, 1
                  %s417 = sphi %s374, %s374
                  %s418 = sphi %s364, %s364
                $region110: #{random_resized_crop_seg.1} parent=99 // loop_header_branch
                  %415 = sbr.rel (%p413) target = $region114
                $region111: #{random_resized_crop_seg.1} parent=99 // loop_body
                  %v419 = vld [vmem:[%s417] sm:%s410]
                  %420 = vst [vmem:[%s418] sm:%s410] %v419
                  %v421 = vld [vmem:[%s417 + $0x8] sm:%s410]
                  %422 = vst [vmem:[%s418 + $0x4] sm:%s410] %v421
                  %v423 = vld [vmem:[%s417 + $0x10] sm:%s410]
                  %424 = vst [vmem:[%s418 + $0x8] sm:%s410] %v423
                  %v425 = vld [vmem:[%s417 + $0x18] sm:%s410]
                  %426 = vst [vmem:[%s418 + $0xc] sm:%s410] %v425
                $region112: #{random_resized_crop_seg.1} parent=99 // loop_footer
                  %s416 = sadd.s32 1, %s412
                $region113: #{random_resized_crop_seg.1} parent=99 // loop_footer_branch
                  %411 = sbr.rel target = $region109
                $region114: #{random_resized_crop_seg.1} parent=99 // loop_exit
                  _
              $region100: #{random_resized_crop_seg.1} parent=84 // pred_fallthru
                _
            $region85: #{random_resized_crop_seg.1} parent=80 // pred_fallthru
              _
            // Predicated region
            $region86: #{random_resized_crop_seg.1} parent=80 // pred_check
              _
            $region87: #{random_resized_crop_seg.1} parent=80 // pred_check_branch
              %380 = sbr.rel (0) target = $region89
            $region88: #{random_resized_crop_seg.1} parent=80 // pred_region
              %s382 = ssub.s32 16, 1
              loop: start=0, step=1, limit=1
              $region90: #{random_resized_crop_seg.1} parent=88 // loop_pre_header
                _
              $region91: #{random_resized_crop_seg.1} parent=88 // loop_header
                %s384 = sphi 0, %s388
                %p385 = scmp.ge.s32.totalorder %s384, 1
                %s389 = sphi %s374, %s374
                %s390 = sphi %s364, %s364
              $region92: #{random_resized_crop_seg.1} parent=88 // loop_header_branch
                %387 = sbr.rel (%p385) target = $region96
              $region93: #{random_resized_crop_seg.1} parent=88 // loop_body
                %v391 = vld [vmem:[%s389] sm:%s382]
                %392 = vst [vmem:[%s390] sm:%s382] %v391
                %v393 = vld [vmem:[%s389 + $0x8] sm:%s382]
                %394 = vst [vmem:[%s390 + $0x4] sm:%s382] %v393
                %v395 = vld [vmem:[%s389 + $0x10] sm:%s382]
                %396 = vst [vmem:[%s390 + $0x8] sm:%s382] %v395
                %v397 = vld [vmem:[%s389 + $0x18] sm:%s382]
                %398 = vst [vmem:[%s390 + $0xc] sm:%s382] %v397
              $region94: #{random_resized_crop_seg.1} parent=88 // loop_footer
                %s388 = sadd.s32 1, %s384
              $region95: #{random_resized_crop_seg.1} parent=88 // loop_footer_branch
                %383 = sbr.rel target = $region91
              $region96: #{random_resized_crop_seg.1} parent=88 // loop_exit
                _
            $region89: #{random_resized_crop_seg.1} parent=80 // pred_fallthru
              _
          $region81: #{random_resized_crop_seg.1} parent=76 // pred_fallthru
            _
          %427 = vnop
        $region77: #{random_resized_crop_seg.1} parent=31 // pred_fallthru
          _
      $region32: #{random_resized_crop_seg.1} parent=5 // pred_fallthru
        _
      %p428 = scmp.le.s32.totalorder 1, %s29
      %p429 = scmp.lt.s32.totalorder %s29, 5
      %p430 = pnand %p428, %p429
      %p431 = pneg %p430
      // Predicated region
      $region115: #{random_resized_crop_seg.1} parent=5 // pred_check
        _
      $region116: #{random_resized_crop_seg.1} parent=5 // pred_check_branch
        %433 = sbr.rel (%p430) target = $region118
      $region117: #{random_resized_crop_seg.1} parent=5 // pred_region
        %s434 = ssub.s32 %s29, 1
        %s435 = sand.u32 %s68, 1
        %s436 = sand.u32 %s68, 1
        %s437 = smul.addr %s436, 16
        %s438 = scalar_lea.vmem [#allocation6], %s437
        // Predicated region
        $region119: #{random_resized_crop_seg.1} parent=117 // pred_check
          %p439 = pneg %p81
        $region120: #{random_resized_crop_seg.1} parent=117 // pred_check_branch
          %441 = sbr.rel (%p439) target = $region122
        $region121: #{random_resized_crop_seg.1} parent=117 // pred_region
          _
        $region122: #{random_resized_crop_seg.1} parent=117 // pred_fallthru
          _
        %s442 = sand.u32 %s150, 1
        %s443 = sand.u32 %s150, 1
        %s444 = smul.addr %s443, 16
        %s445 = scalar_lea.vmem [#allocation7], %s444
        // Predicated region
        $region123: #{random_resized_crop_seg.1} parent=117 // pred_check
          %p446 = pneg %p163
        $region124: #{random_resized_crop_seg.1} parent=117 // pred_check_branch
          %448 = sbr.rel (%p446) target = $region126
        $region125: #{random_resized_crop_seg.1} parent=117 // pred_region
          _
        $region126: #{random_resized_crop_seg.1} parent=117 // pred_fallthru
          _
        %s449 = sand.u32 %s68, 1
        %s450 = sand.u32 %s68, 1
        %s451 = smul.addr %s450, 16
        %s452 = scalar_lea.vmem [#allocation6], %s451
        %p453 = pneg %p81
        %p454 = pneg %p78
        %p455 = pneg %p102
        %p456 = pneg %p99
        %p457 = pneg %p123
        %p458 = pneg %p120
        %s459 = sand.u32 %s150, 1
        %s460 = sand.u32 %s150, 1
        %s461 = smul.addr %s460, 16
        %s462 = scalar_lea.vmem [#allocation7], %s461
        %p463 = pneg %p163
        %p464 = pneg %p160
        %p465 = pneg %p184
        %p466 = pneg %p181
        %p467 = pneg %p205
        %p468 = pneg %p202
        %p469 = pneg %p231
        %p470 = pneg %p228
        %s471 = sand.u32 %s218, 1
        %s472 = scalar_lea.sflag [#allocation9], %s471
        %s473 = sand.u32 %s218, 1
        %s474 = smul.addr %s473, 32
        %s475 = scalar_lea.vmem [#allocation8], %s474
        %p476 = pneg %p257
        %p477 = pneg %p254
        %s478 = sand.u32 %s244, 1
        %s479 = scalar_lea.sflag [#allocation11], %s478
        %s480 = sand.u32 %s244, 1
        %s481 = smul.addr %s480, 32
        %s482 = scalar_lea.vmem [#allocation10], %s481
        %s483 = sld [smem:[#allocation5 + $0x4]]
        %s484 = sld [smem:[#allocation5 + $0x5]]
        %p485 = scmp.gt.s32.totalorder %s483, %s39
        %s486 = scalar_select %p485, %s483, %s39
        %p487 = scmp.lt.s32.totalorder %s484, %s486
        %s488 = scalar_select %p487, %s484, %s486
        %s489 = sld [smem:[#allocation5 + $0x4]]
        %s490 = sld [smem:[#allocation5 + $0x5]]
        %p491 = scmp.gt.s32.totalorder %s489, %s39
        %s492 = scalar_select %p491, %s489, %s39
        %p493 = scmp.lt.s32.totalorder %s490, %s492
        %s494 = scalar_select %p493, %s490, %s492
        %s496 = sld [smem:[#allocation5 + $0x4]]
        %s497 = sld [smem:[#allocation5 + $0x5]]
        %p498 = scmp.eq.s32.totalorder %s39, 0
        // Predicated region
        $region127: #{random_resized_crop_seg.1} parent=117 // pred_check
          %p499 = pneg %p498
        $region128: #{random_resized_crop_seg.1} parent=117 // pred_check_branch
          %501 = sbr.rel (%p499) target = $region130
        $region129: #{random_resized_crop_seg.1} parent=117 // pred_region
          %vm502 = vcmask 130048
          %503 = vst.msk [vmem:[#allocation2] sm:$0xff] %vm502, 0.0
          %504 = vst.msk [vmem:[#allocation2 + $0x8] sm:$0xff] %vm502, 0.0
          %505 = vst.msk [vmem:[#allocation2 + $0x10] sm:$0xff] %vm502, 0.0
          %506 = vst.msk [vmem:[#allocation2 + $0x18] sm:$0xff] %vm502, 0.0
          %507 = vst.msk [vmem:[#allocation3] sm:$0xff] %vm502, 0.0
          %508 = vst.msk [vmem:[#allocation3 + $0x8] sm:$0xff] %vm502, 0.0
          %509 = vst.msk [vmem:[#allocation3 + $0x10] sm:$0xff] %vm502, 0.0
          %510 = vst.msk [vmem:[#allocation3 + $0x18] sm:$0xff] %vm502, 0.0
        $region130: #{random_resized_crop_seg.1} parent=117 // pred_fallthru
          _
        %p511 = scmp.ge.s32.totalorder %s39, %s496
        %p512 = scmp.le.s32.totalorder %s39, %s497
        %p513 = pnand %p511, %p512
        %p514 = pneg %p513
        // Predicated region
        $region131: #{random_resized_crop_seg.1} parent=117 // pred_check
          _
        $region132: #{random_resized_crop_seg.1} parent=117 // pred_check_branch
          %516 = sbr.rel (%p513) target = $region134
        $region133: #{random_resized_crop_seg.1} parent=117 // pred_region
          %s517 = smul.addr %s39, 4
          %s518 = scalar_lea.vmem %s2, %s517
          %v519 = vld [vmem:[%s518] sm:$0xf]
          %s520 = smul.addr %s39, 4
          %s521 = scalar_lea.vmem %s5, %s520
          %v522 = vld [vmem:[%s521] sm:$0xf]
          %v523 = vld [vmem:[#allocation2] sm:$0xff]
          %v524 = vld [vmem:[%s438] sm:$0xf]
          %vm525 = vcmask 64512
          %v527 = vsel %vm525, %v519, 0
          %vm529 = vcmask 1043456
          %v531 = vsel %vm529, %v524, 0
          %533 = vmatpush.bf16.msra.mxu0 0
          %534 = vmatpush.bf16.msra.mxu0 0
          %535 = vmatpush.bf16.msra.mxu0 0
          %536 = vmatpush.bf16.msra.mxu0 0
          %537 = vmatpush.bf16.msra.mxu0 0
          %538 = vmatpush.bf16.msra.mxu0 0
          %539 = vmatpush.bf16.msra.mxu0 0
          %540 = vmatpush.bf16.msra.mxu0 %v531
          %541 = vmatmul.bf16.gmra.mxu0 %v527
          %v542 = vpop.f32.mrf.mxu0
          %v543 = vadd.f32 0.0, %v542
          %v544 = vpop.f32.mrf.mxu0
          %545 = vdwg.mxu0
          %v546 = vadd.f32 %v523, %v543
          %vm547 = vcmask 130048
          %548 = vst.msk [vmem:[#allocation2] sm:$0xff] %vm547, %v546
          %v549 = vld [vmem:[#allocation3] sm:$0xff]
          %v550 = vld [vmem:[%s445] sm:$0xf]
          %v552 = vsel %vm525, %v522, 0
          %v555 = vsel %vm529, %v550, 0
          %557 = vmatpush.bf16.msra.mxu0 0
          %558 = vmatpush.bf16.msra.mxu0 0
          %559 = vmatpush.bf16.msra.mxu0 0
          %560 = vmatpush.bf16.msra.mxu0 0
          %561 = vmatpush.bf16.msra.mxu0 0
          %562 = vmatpush.bf16.msra.mxu0 0
          %563 = vmatpush.bf16.msra.mxu0 0
          %564 = vmatpush.bf16.msra.mxu0 %v555
          %565 = vmatmul.bf16.gmra.mxu0 %v552
          %v566 = vpop.f32.mrf.mxu0
          %v567 = vadd.f32 0.0, %v566
          %v568 = vpop.f32.mrf.mxu0
          %569 = vdwg.mxu0
          %v570 = vadd.f32 %v549, %v567
          %571 = vst.msk [vmem:[#allocation3] sm:$0xff] %vm547, %v570
          %s572 = scalar_lea.vmem [#allocation2], 8
          %v573 = vld [vmem:[%s572] sm:$0xff]
          %s574 = scalar_lea.vmem %s438, 4 [#allocation6]
          %v575 = vld [vmem:[%s574] sm:$0xf]
          %v577 = vsel %vm529, %v575, 0
          %579 = vmatpush.bf16.msra.mxu0 0
          %580 = vmatpush.bf16.msra.mxu0 0
          %581 = vmatpush.bf16.msra.mxu0 0
          %582 = vmatpush.bf16.msra.mxu0 0
          %583 = vmatpush.bf16.msra.mxu0 0
          %584 = vmatpush.bf16.msra.mxu0 0
          %585 = vmatpush.bf16.msra.mxu0 0
          %586 = vmatpush.bf16.msra.mxu0 %v577
          %587 = vmatmul.bf16.gmra.mxu0 %v527
          %v588 = vpop.f32.mrf.mxu0
          %v589 = vadd.f32 0.0, %v588
          %v590 = vpop.f32.mrf.mxu0
          %591 = vdwg.mxu0
          %v592 = vadd.f32 %v573, %v589
          %593 = vst.msk [vmem:[%s572] sm:$0xff] %vm547, %v592
          %s594 = scalar_lea.vmem [#allocation3], 8
          %v595 = vld [vmem:[%s594] sm:$0xff]
          %s596 = scalar_lea.vmem %s445, 4 [#allocation7]
          %v597 = vld [vmem:[%s596] sm:$0xf]
          %v599 = vsel %vm529, %v597, 0
          %601 = vmatpush.bf16.msra.mxu0 0
          %602 = vmatpush.bf16.msra.mxu0 0
          %603 = vmatpush.bf16.msra.mxu0 0
          %604 = vmatpush.bf16.msra.mxu0 0
          %605 = vmatpush.bf16.msra.mxu0 0
          %606 = vmatpush.bf16.msra.mxu0 0
          %607 = vmatpush.bf16.msra.mxu0 0
          %608 = vmatpush.bf16.msra.mxu0 %v599
          %609 = vmatmul.bf16.gmra.mxu0 %v552
          %v610 = vpop.f32.mrf.mxu0
          %v611 = vadd.f32 0.0, %v610
          %v612 = vpop.f32.mrf.mxu0
          %613 = vdwg.mxu0
          %v614 = vadd.f32 %v595, %v611
          %615 = vst.msk [vmem:[%s594] sm:$0xff] %vm547, %v614
          %s616 = scalar_lea.vmem [#allocation2], 16
          %v617 = vld [vmem:[%s616] sm:$0xff]
          %s618 = scalar_lea.vmem %s438, 8 [#allocation6]
          %v619 = vld [vmem:[%s618] sm:$0xf]
          %v621 = vsel %vm529, %v619, 0
          %623 = vmatpush.bf16.msra.mxu0 0
          %624 = vmatpush.bf16.msra.mxu0 0
          %625 = vmatpush.bf16.msra.mxu0 0
          %626 = vmatpush.bf16.msra.mxu0 0
          %627 = vmatpush.bf16.msra.mxu0 0
          %628 = vmatpush.bf16.msra.mxu0 0
          %629 = vmatpush.bf16.msra.mxu0 0
          %630 = vmatpush.bf16.msra.mxu0 %v621
          %631 = vmatmul.bf16.gmra.mxu0 %v527
          %v632 = vpop.f32.mrf.mxu0
          %v633 = vadd.f32 0.0, %v632
          %v634 = vpop.f32.mrf.mxu0
          %635 = vdwg.mxu0
          %v636 = vadd.f32 %v617, %v633
          %637 = vst.msk [vmem:[%s616] sm:$0xff] %vm547, %v636
          %s638 = scalar_lea.vmem [#allocation3], 16
          %v639 = vld [vmem:[%s638] sm:$0xff]
          %s640 = scalar_lea.vmem %s445, 8 [#allocation7]
          %v641 = vld [vmem:[%s640] sm:$0xf]
          %v643 = vsel %vm529, %v641, 0
          %645 = vmatpush.bf16.msra.mxu0 0
          %646 = vmatpush.bf16.msra.mxu0 0
          %647 = vmatpush.bf16.msra.mxu0 0
          %648 = vmatpush.bf16.msra.mxu0 0
          %649 = vmatpush.bf16.msra.mxu0 0
          %650 = vmatpush.bf16.msra.mxu0 0
          %651 = vmatpush.bf16.msra.mxu0 0
          %652 = vmatpush.bf16.msra.mxu0 %v643
          %653 = vmatmul.bf16.gmra.mxu0 %v552
          %v654 = vpop.f32.mrf.mxu0
          %v655 = vadd.f32 0.0, %v654
          %v656 = vpop.f32.mrf.mxu0
          %657 = vdwg.mxu0
          %v658 = vadd.f32 %v639, %v655
          %659 = vst.msk [vmem:[%s638] sm:$0xff] %vm547, %v658
          %s660 = scalar_lea.vmem [#allocation2], 24
          %v661 = vld [vmem:[%s660] sm:$0xff]
          %s662 = scalar_lea.vmem %s438, 12 [#allocation6]
          %v663 = vld [vmem:[%s662] sm:$0xf]
          %v665 = vsel %vm529, %v663, 0
          %667 = vmatpush.bf16.msra.mxu0 0
          %668 = vmatpush.bf16.msra.mxu0 0
          %669 = vmatpush.bf16.msra.mxu0 0
          %670 = vmatpush.bf16.msra.mxu0 0
          %671 = vmatpush.bf16.msra.mxu0 0
          %672 = vmatpush.bf16.msra.mxu0 0
          %673 = vmatpush.bf16.msra.mxu0 0
          %674 = vmatpush.bf16.msra.mxu0 %v665
          %675 = vmatmul.bf16.gmra.mxu0 %v527
          %v676 = vpop.f32.mrf.mxu0
          %v677 = vadd.f32 0.0, %v676
          %v678 = vpop.f32.mrf.mxu0
          %679 = vdwg.mxu0
          %v680 = vadd.f32 %v661, %v677
          %681 = vst.msk [vmem:[%s660] sm:$0xff] %vm547, %v680
          %s682 = scalar_lea.vmem [#allocation3], 24
          %v683 = vld [vmem:[%s682] sm:$0xff]
          %s684 = scalar_lea.vmem %s445, 12 [#allocation7]
          %v685 = vld [vmem:[%s684] sm:$0xf]
          %v687 = vsel %vm529, %v685, 0
          %689 = vmatpush.bf16.msra.mxu0 0
          %690 = vmatpush.bf16.msra.mxu0 0
          %691 = vmatpush.bf16.msra.mxu0 0
          %692 = vmatpush.bf16.msra.mxu0 0
          %693 = vmatpush.bf16.msra.mxu0 0
          %694 = vmatpush.bf16.msra.mxu0 0
          %695 = vmatpush.bf16.msra.mxu0 0
          %696 = vmatpush.bf16.msra.mxu0 %v687
          %697 = vmatmul.bf16.gmra.mxu0 %v552
          %v698 = vpop.f32.mrf.mxu0
          %v699 = vadd.f32 0.0, %v698
          %v700 = vpop.f32.mrf.mxu0
          %701 = vdwg.mxu0
          %v702 = vadd.f32 %v683, %v699
          %703 = vst.msk [vmem:[%s682] sm:$0xff] %vm547, %v702
        $region134: #{random_resized_crop_seg.1} parent=117 // pred_fallthru
          _
        %p704 = scmp.eq.s32.totalorder %s39, 1
        // Predicated region
        $region135: #{random_resized_crop_seg.1} parent=117 // pred_check
          %p705 = pneg %p704
        $region136: #{random_resized_crop_seg.1} parent=117 // pred_check_branch
          %707 = sbr.rel (%p705) target = $region138
        $region137: #{random_resized_crop_seg.1} parent=117 // pred_region
          %v708 = vld [vmem:[%s3] sm:$0xf]
          %v709 = vld [vmem:[%s3 + $0x4] sm:$0xf]
          %v710 = vld [vmem:[%s6] sm:$0xf]
          %v711 = vld [vmem:[%s6 + $0x4] sm:$0xf]
          %v712 = vld [vmem:[#allocation2] sm:$0xff]
          %v713 = vpack.c.bf16 %v712, %v712
          %v716 = vunpack.c.l.b16 %v708
          %v717 = vunpack.c.l.b16 %v709
          %v718 = vpack.c.b16 %v717, %v716
          %vm720 = vcmask 130048
          %v722 = vsel %vm720, %v713, 0
          %724 = vmatpush.bf16.msra.mxu0 0
          %725 = vmatpush.bf16.msra.mxu0 0
          %726 = vmatpush.bf16.msra.mxu0 0
          %727 = vmatpush.bf16.msra.mxu0 0
          %728 = vmatpush.bf16.msra.mxu0 0
          %729 = vmatpush.bf16.msra.mxu0 0
          %730 = vmatpush.bf16.msra.mxu0 0
          %731 = vmatpush.bf16.msra.mxu0 %v718
          %732 = vmatmul.bf16.gmra.mxu0 %v722
          %v733 = vpop.f32.mrf.mxu0
          %v734 = vadd.f32 0.0, %v733
          %v735 = vpop.f32.mrf.mxu0
          %736 = vdwg.mxu0
          %v737 = vld [vmem:[#allocation3] sm:$0xff]
          %v738 = vpack.c.bf16 %v737, %v737
          %v741 = vunpack.c.l.b16 %v710
          %v742 = vunpack.c.l.b16 %v711
          %v743 = vpack.c.b16 %v742, %v741
          %v746 = vsel %vm720, %v738, 0
          %748 = vmatpush.bf16.msra.mxu0 0
          %749 = vmatpush.bf16.msra.mxu0 0
          %750 = vmatpush.bf16.msra.mxu0 0
          %751 = vmatpush.bf16.msra.mxu0 0
          %752 = vmatpush.bf16.msra.mxu0 0
          %753 = vmatpush.bf16.msra.mxu0 0
          %754 = vmatpush.bf16.msra.mxu0 0
          %755 = vmatpush.bf16.msra.mxu0 %v743
          %756 = vmatmul.bf16.gmra.mxu0 %v746
          %v757 = vpop.f32.mrf.mxu0
          %v758 = vadd.f32 0.0, %v757
          %v759 = vpop.f32.mrf.mxu0
          %760 = vdwg.mxu0
          %vm761 = vcmask 64512
          %762 = vst.msk [vmem:[%s475] sm:$0xff] %vm761, %v734
          %763 = vst.msk [vmem:[%s482] sm:$0xff] %vm761, %v758
          %s764 = scalar_lea.vmem [#allocation2], 8
          %v765 = vld [vmem:[%s764] sm:$0xff]
          %v766 = vpack.c.bf16 %v765, %v765
          %v768 = vsel %vm720, %v766, 0
          %770 = vmatpush.bf16.msra.mxu0 0
          %771 = vmatpush.bf16.msra.mxu0 0
          %772 = vmatpush.bf16.msra.mxu0 0
          %773 = vmatpush.bf16.msra.mxu0 0
          %774 = vmatpush.bf16.msra.mxu0 0
          %775 = vmatpush.bf16.msra.mxu0 0
          %776 = vmatpush.bf16.msra.mxu0 0
          %777 = vmatpush.bf16.msra.mxu0 %v718
          %778 = vmatmul.bf16.gmra.mxu0 %v768
          %v779 = vpop.f32.mrf.mxu0
          %v780 = vadd.f32 0.0, %v779
          %v781 = vpop.f32.mrf.mxu0
          %782 = vdwg.mxu0
          %s783 = scalar_lea.vmem [#allocation3], 8
          %v784 = vld [vmem:[%s783] sm:$0xff]
          %v785 = vpack.c.bf16 %v784, %v784
          %v787 = vsel %vm720, %v785, 0
          %789 = vmatpush.bf16.msra.mxu0 0
          %790 = vmatpush.bf16.msra.mxu0 0
          %791 = vmatpush.bf16.msra.mxu0 0
          %792 = vmatpush.bf16.msra.mxu0 0
          %793 = vmatpush.bf16.msra.mxu0 0
          %794 = vmatpush.bf16.msra.mxu0 0
          %795 = vmatpush.bf16.msra.mxu0 0
          %796 = vmatpush.bf16.msra.mxu0 %v743
          %797 = vmatmul.bf16.gmra.mxu0 %v787
          %v798 = vpop.f32.mrf.mxu0
          %v799 = vadd.f32 0.0, %v798
          %v800 = vpop.f32.mrf.mxu0
          %801 = vdwg.mxu0
          %s802 = scalar_lea.vmem %s475, 8 [#allocation8]
          %803 = vst.msk [vmem:[%s802] sm:$0xff] %vm761, %v780
          %s804 = scalar_lea.vmem %s482, 8 [#allocation10]
          %805 = vst.msk [vmem:[%s804] sm:$0xff] %vm761, %v799
          %s806 = scalar_lea.vmem [#allocation2], 16
          %v807 = vld [vmem:[%s806] sm:$0xff]
          %v808 = vpack.c.bf16 %v807, %v807
          %v810 = vsel %vm720, %v808, 0
          %812 = vmatpush.bf16.msra.mxu0 0
          %813 = vmatpush.bf16.msra.mxu0 0
          %814 = vmatpush.bf16.msra.mxu0 0
          %815 = vmatpush.bf16.msra.mxu0 0
          %816 = vmatpush.bf16.msra.mxu0 0
          %817 = vmatpush.bf16.msra.mxu0 0
          %818 = vmatpush.bf16.msra.mxu0 0
          %819 = vmatpush.bf16.msra.mxu0 %v718
          %820 = vmatmul.bf16.gmra.mxu0 %v810
          %v821 = vpop.f32.mrf.mxu0
          %v822 = vadd.f32 0.0, %v821
          %v823 = vpop.f32.mrf.mxu0
          %824 = vdwg.mxu0
          %s825 = scalar_lea.vmem [#allocation3], 16
          %v826 = vld [vmem:[%s825] sm:$0xff]
          %v827 = vpack.c.bf16 %v826, %v826
          %v829 = vsel %vm720, %v827, 0
          %831 = vmatpush.bf16.msra.mxu0 0
          %832 = vmatpush.bf16.msra.mxu0 0
          %833 = vmatpush.bf16.msra.mxu0 0
          %834 = vmatpush.bf16.msra.mxu0 0
          %835 = vmatpush.bf16.msra.mxu0 0
          %836 = vmatpush.bf16.msra.mxu0 0
          %837 = vmatpush.bf16.msra.mxu0 0
          %838 = vmatpush.bf16.msra.mxu0 %v743
          %839 = vmatmul.bf16.gmra.mxu0 %v829
          %v840 = vpop.f32.mrf.mxu0
          %v841 = vadd.f32 0.0, %v840
          %v842 = vpop.f32.mrf.mxu0
          %843 = vdwg.mxu0
          %s844 = scalar_lea.vmem %s475, 16 [#allocation8]
          %845 = vst.msk [vmem:[%s844] sm:$0xff] %vm761, %v822
          %s846 = scalar_lea.vmem %s482, 16 [#allocation10]
          %847 = vst.msk [vmem:[%s846] sm:$0xff] %vm761, %v841
          %s848 = scalar_lea.vmem [#allocation2], 24
          %v849 = vld [vmem:[%s848] sm:$0xff]
          %v850 = vpack.c.bf16 %v849, %v849
          %v852 = vsel %vm720, %v850, 0
          %854 = vmatpush.bf16.msra.mxu0 0
          %855 = vmatpush.bf16.msra.mxu0 0
          %856 = vmatpush.bf16.msra.mxu0 0
          %857 = vmatpush.bf16.msra.mxu0 0
          %858 = vmatpush.bf16.msra.mxu0 0
          %859 = vmatpush.bf16.msra.mxu0 0
          %860 = vmatpush.bf16.msra.mxu0 0
          %861 = vmatpush.bf16.msra.mxu0 %v718
          %862 = vmatmul.bf16.gmra.mxu0 %v852
          %v863 = vpop.f32.mrf.mxu0
          %v864 = vadd.f32 0.0, %v863
          %v865 = vpop.f32.mrf.mxu0
          %866 = vdwg.mxu0
          %s867 = scalar_lea.vmem [#allocation3], 24
          %v868 = vld [vmem:[%s867] sm:$0xff]
          %v869 = vpack.c.bf16 %v868, %v868
          %v871 = vsel %vm720, %v869, 0
          %873 = vmatpush.bf16.msra.mxu0 0
          %874 = vmatpush.bf16.msra.mxu0 0
          %875 = vmatpush.bf16.msra.mxu0 0
          %876 = vmatpush.bf16.msra.mxu0 0
          %877 = vmatpush.bf16.msra.mxu0 0
          %878 = vmatpush.bf16.msra.mxu0 0
          %879 = vmatpush.bf16.msra.mxu0 0
          %880 = vmatpush.bf16.msra.mxu0 %v743
          %881 = vmatmul.bf16.gmra.mxu0 %v871
          %v882 = vpop.f32.mrf.mxu0
          %v883 = vadd.f32 0.0, %v882
          %v884 = vpop.f32.mrf.mxu0
          %885 = vdwg.mxu0
          %s886 = scalar_lea.vmem %s475, 24 [#allocation8]
          %887 = vst.msk [vmem:[%s886] sm:$0xff] %vm761, %v864
          %s888 = scalar_lea.vmem %s482, 24 [#allocation10]
          %889 = vst.msk [vmem:[%s888] sm:$0xff] %vm761, %v883
        $region138: #{random_resized_crop_seg.1} parent=117 // pred_fallthru
          _
        %s890 = sand.u32 %s218, 1
        %s891 = scalar_lea.sflag [#allocation9], %s890
        %s892 = sand.u32 %s218, 1
        %s893 = smul.addr %s892, 32
        %s894 = scalar_lea.vmem [#allocation8], %s893
        %s895 = sand.u32 %s244, 1
        %s896 = scalar_lea.sflag [#allocation11], %s895
        %s897 = sand.u32 %s244, 1
        %s898 = smul.addr %s897, 32
        %s899 = scalar_lea.vmem [#allocation10], %s898
        // Predicated region
        $region139: #{random_resized_crop_seg.1} parent=117 // pred_check
          %p900 = pneg %p228
        $region140: #{random_resized_crop_seg.1} parent=117 // pred_check_branch
          %902 = sbr.rel (%p900) target = $region142
        $region141: #{random_resized_crop_seg.1} parent=117 // pred_region
          %904 = vsyncadd %s891, 0
          %s905 = smul.addr %s38, 4
          %s906 = smul.addr %s905, 8
          %s907 = scalar_lea.hbm %s7, %s906
          %s908 = sshll.u32 %s894, 4
          %s909 = int_to_ptr.vmem [resolvable:$true] %s908
          %s910 = sshll.u32 %s907, 4
          %s911 = int_to_ptr.hbm [resolvable:$true] %s910
          %916 = dma.vmem_to_hbm [thread:$0]  %s909, 512, %s911, %s891, 128, 128, 8
        $region142: #{random_resized_crop_seg.1} parent=117 // pred_fallthru
          _
        // Predicated region
        $region143: #{random_resized_crop_seg.1} parent=117 // pred_check
          %p917 = pneg %p254
        $region144: #{random_resized_crop_seg.1} parent=117 // pred_check_branch
          %919 = sbr.rel (%p917) target = $region146
        $region145: #{random_resized_crop_seg.1} parent=117 // pred_region
          %921 = vsyncadd %s896, 0
          %s922 = smul.addr %s38, 4
          %s923 = smul.addr %s922, 8
          %s924 = scalar_lea.hbm %s8, %s923
          %s925 = sshll.u32 %s899, 4
          %s926 = int_to_ptr.vmem [resolvable:$true] %s925
          %s927 = sshll.u32 %s924, 4
          %s928 = int_to_ptr.hbm [resolvable:$true] %s927
          %933 = dma.vmem_to_hbm [thread:$0]  %s926, 512, %s928, %s896, 128, 128, 8
        $region146: #{random_resized_crop_seg.1} parent=117 // pred_fallthru
          _
      $region118: #{random_resized_crop_seg.1} parent=5 // pred_fallthru
        _
      %p934 = scmp.le.s32.totalorder 2, %s29
      // Predicated region
      $region147: #{random_resized_crop_seg.1} parent=5 // pred_check
        %p935 = pneg %p934
      $region148: #{random_resized_crop_seg.1} parent=5 // pred_check_branch
        %937 = sbr.rel (%p935) target = $region150
      $region149: #{random_resized_crop_seg.1} parent=5 // pred_region
        %s938 = ssub.s32 %s29, 2
        // Predicated region
        $region151: #{random_resized_crop_seg.1} parent=149 // pred_check
          %p939 = pneg %p234
        $region152: #{random_resized_crop_seg.1} parent=149 // pred_check_branch
          %941 = sbr.rel (%p939) target = $region154
        $region153: #{random_resized_crop_seg.1} parent=149 // pred_region
          %s942 = sand.u32 %s219, 1
          %s943 = scalar_lea.sflag [#allocation9], %s942
          %s944 = sand.u32 %s219, 1
          %s945 = smul.addr %s944, 32
          %s946 = scalar_lea.vmem [#allocation8], %s945
          %948 = dma.done %s943, 512
        $region154: #{random_resized_crop_seg.1} parent=149 // pred_fallthru
          _
        // Predicated region
        $region155: #{random_resized_crop_seg.1} parent=149 // pred_check
          %p949 = pneg %p260
        $region156: #{random_resized_crop_seg.1} parent=149 // pred_check_branch
          %951 = sbr.rel (%p949) target = $region158
        $region157: #{random_resized_crop_seg.1} parent=149 // pred_region
          %s952 = sand.u32 %s245, 1
          %s953 = scalar_lea.sflag [#allocation11], %s952
          %s954 = sand.u32 %s245, 1
          %s955 = smul.addr %s954, 32
          %s956 = scalar_lea.vmem [#allocation10], %s955
          %958 = dma.done %s953, 512
        $region158: #{random_resized_crop_seg.1} parent=149 // pred_fallthru
          _
      $region150: #{random_resized_crop_seg.1} parent=5 // pred_fallthru
        _
    $region6: #{random_resized_crop_seg.1} parent=1 // loop_footer
      %s33 = sadd.s32 1, %s29
    $region7: #{random_resized_crop_seg.1} parent=1 // loop_footer_branch
      %28 = sbr.rel target = $region3
    $region8: #{random_resized_crop_seg.1} parent=1 // loop_exit
      _
    %959 = vsyncpa [#allocation9], 1
    %s960 = scalar_lea.sflag [#allocation9], 1
    %961 = vsyncpa %s960, 1
    %962 = vsyncpa [#allocation11], 1
    %s963 = scalar_lea.sflag [#allocation11], 1
    %964 = vsyncpa %s963, 1

</llo_original>
